<compile_context>
chip_gen: v7x
topology: tpu7x:2x2x1
jax: 0.10.0
libtpu: 0.0.40
codegen_flags: <defaults>
</compile_context>

<pallas_src>
import jax
import jax.numpy as jnp
from jax.experimental import pallas as pl
from jax.experimental.pallas import tpu as pltpu

# Real layer sizes (PyTorch module) and lane-padded sizes used inside the kernel.
H1, H1P = 400, 512          # layer 1/4 hidden, padded to 4*128 per head
H2, H2P = 300, 384          # layer 2/5 hidden, padded to 3*128 per head
NQP = 128                   # final output padded to one full lane group (cols 0,1 used)
BIAS_W = 2 * H1P + 2 * H2P + NQP   # 1920 = 15*128 (packed-bias width)


def _round_up(v, m):
    return ((v + m - 1) // m) * m


# ----------------------------------------------------------------------------
# Kernel: fused twin Q-network forward (per-head layers 2/5 and 3/6 un-fused)
# ----------------------------------------------------------------------------
def critic_kernel(x_ref, u_ref,
                  wx_ref, wu_ref,
                  w2_ref, w5_ref,
                  w3_ref, w6_ref,
                  b_ref, q_ref):
    bf16 = jnp.bfloat16
    x = x_ref[...].astype(bf16)
    u = u_ref[...].astype(bf16)

    # Packed biases (f32), sliced at 128-lane-aligned offsets: 0, 1024, 1408, 1792.
    b14 = b_ref[:, 0:2 * H1P]
    b2 = b_ref[:, 2 * H1P:2 * H1P + H2P]
    b5 = b_ref[:, 2 * H1P + H2P:2 * H1P + 2 * H2P]
    b36 = b_ref[:, 2 * H1P + 2 * H2P:BIAS_W]

    # Fused layer_1 / layer_4: both heads in one (in, 2*H1P) weight.  x and u
    # are dotted separately (layer-1 weight rows split at pack time) so the
    # wrapper never materializes cat([x, u], 1) in HBM.
    h = (jnp.dot(x, wx_ref[...], preferred_element_type=jnp.float32)
         + jnp.dot(u, wu_ref[...], preferred_element_type=jnp.float32)
         + b14)
    h = jnp.maximum(h, 0.0).astype(bf16)          # ReLU, back to bf16 for MXU
    h1 = h[:, :H1P]                               # head-1 hidden (lane-aligned slice)
    h2 = h[:, H1P:]                               # head-2 hidden

    # Un-fused layer_2 / layer_5: per-head (H1P, H2P) weights — no zero block,
    # half the MXU work and half the weight bytes of the old block-diag fusion.
    g1 = jnp.dot(h1, w2_ref[...], preferred_element_type=jnp.float32) + b2
    g1 = jnp.maximum(g1, 0.0).astype(bf16)
    g2 = jnp.dot(h2, w5_ref[...], preferred_element_type=jnp.float32) + b5
    g2 = jnp.maximum(g2, 0.0).astype(bf16)

    # layer_3 / layer_6: two (H2P, NQP) dots summed — q1 lands in lane 0,
    # q2 in lane 1, remaining lanes exactly zero -> one unmasked lane-dense store.
    q = (jnp.dot(g1, w3_ref[...], preferred_element_type=jnp.float32)
         + jnp.dot(g2, w6_ref[...], preferred_element_type=jnp.float32)
         + b36)
    q_ref[...] = q.astype(q_ref.dtype)


# ----------------------------------------------------------------------------
# Wrapper
# ----------------------------------------------------------------------------
def _select_batch_tile(B):
    """VMEM-bounded, megacore-friendly batch tile (shapes are static under jit)."""
    if B <= 128:
        return _round_up(max(B, 1), 8)            # one block, tiny batches
    if B < 1024:
        return _round_up(pl.cdiv(B, 2), 8)        # 2 grid steps -> both v7x TCs
    return 512                                    # fixed tile: bounded VMEM for any B


def critic_forward(x, u, packed):
    """Replicates Critic.forward(x, u) -> (q1, q2)."""
    B, S = x.shape
    A = u.shape[1]

    tb = _select_batch_tile(B)
    nb = pl.cdiv(B, tb)
    Bp = nb * tb
    if Bp != B:
        # Zero-pad ragged batches; padded rows only see biases and are sliced off.
        x = jnp.pad(x, ((0, Bp - B), (0, 0)))
        u = jnp.pad(u, ((0, Bp - B), (0, 0)))

    row = lambda i: (i, 0)      # batch-tiled operands
    rep = lambda i: (0, 0)      # weights/biases: same block every step (VMEM-resident)

    out = pl.pallas_call(
        critic_kernel,
        grid=(nb,),
        in_specs=[
            pl.BlockSpec((tb, S), row),
            pl.BlockSpec((tb, A), row),
            pl.BlockSpec(packed["wx14"].shape, rep),
            pl.BlockSpec(packed["wu14"].shape, rep),
            pl.BlockSpec(packed["w2"].shape, rep),
            pl.BlockSpec(packed["w5"].shape, rep),
            pl.BlockSpec(packed["w3"].shape, rep),
            pl.BlockSpec(packed["w6"].shape, rep),
            pl.BlockSpec(packed["bias"].shape, rep),
        ],
        out_specs=pl.BlockSpec((tb, NQP), row),
        out_shape=jax.ShapeDtypeStruct((Bp, NQP), jnp.float32),
        compiler_params=pltpu.CompilerParams(
            dimension_semantics=("parallel",),
            vmem_limit_bytes=32 * 1024 * 1024),
    )(x, u,
      packed["wx14"], packed["wu14"],
      packed["w2"], packed["w5"],
      packed["w3"], packed["w6"],
      packed["bias"])

    q1 = out[:B, 0:1]
    q2 = out[:B, 1:2]
    return q1, q2


# ----------------------------------------------------------------------------
# Parameter init (PyTorch nn.Linear: U(-1/sqrt(fan_in), 1/sqrt(fan_in))
# for BOTH weight and bias) in (in_features, out_features) layout.
# ----------------------------------------------------------------------------
def init_raw_params(key, state_dim, action_dim):
    in_dim = state_dim + action_dim
    layers = [("1", in_dim, 400), ("2", 400, 300), ("3", 300, 1),
              ("4", in_dim, 400), ("5", 400, 300), ("6", 300, 1)]
    params = {}
    keys = jax.random.split(key, 2 * len(layers))
    for idx, (name, fan_in, fan_out) in enumerate(layers):
        bound = 1.0 / (float(fan_in) ** 0.5)
        params[f"w{name}"] = jax.random.uniform(
            keys[2 * idx], (fan_in, fan_out), jnp.float32, -bound, bound)
        params[f"b{name}"] = jax.random.uniform(
            keys[2 * idx + 1], (1, fan_out), jnp.float32, -bound, bound)
    return params


# ----------------------------------------------------------------------------
# Pack raw per-layer params into lane-padded, bf16 kernel weights.
# All padding is zeros -> numerically inert (relu(0)=0, 0*w=0); padded bias
# lanes MUST stay zero (invariant relied on by the kernel).
# ----------------------------------------------------------------------------
def pack_params(p, state_dim, action_dim):
    S, A = state_dim, action_dim
    f32, bf16 = jnp.float32, jnp.bfloat16

    # layer_1 / layer_4: heads fused on lanes, rows split into x-part and u-part.
    wx = jnp.zeros((S, 2 * H1P), f32)
    wx = wx.at[:, :H1].set(p["w1"][:S]).at[:, H1P:H1P + H1].set(p["w4"][:S])
    wu = jnp.zeros((A, 2 * H1P), f32)
    wu = wu.at[:, :H1].set(p["w1"][S:]).at[:, H1P:H1P + H1].set(p["w4"][S:])
    b14 = jnp.zeros((1, 2 * H1P), f32)
    b14 = b14.at[:, :H1].set(p["b1"]).at[:, H1P:H1P + H1].set(p["b4"])

    # layer_2 / layer_5: per-head, un-fused (no zero block).
    w2 = jnp.zeros((H1P, H2P), f32).at[:H1, :H2].set(p["w2"])
    w5 = jnp.zeros((H1P, H2P), f32).at[:H1, :H2].set(p["w5"])
    b2 = jnp.zeros((1, H2P), f32).at[:, :H2].set(p["b2"])
    b5 = jnp.zeros((1, H2P), f32).at[:, :H2].set(p["b5"])

    # layer_3 / layer_6: per-head, q1 into lane 0 and q2 into lane 1 of a
    # 128-wide output (padded columns are exact zeros).
    w3 = jnp.zeros((H2P, NQP), f32).at[:H2, 0:1].set(p["w3"])
    w6 = jnp.zeros((H2P, NQP), f32).at[:H2, 1:2].set(p["w6"])
    b36 = jnp.zeros((1, NQP), f32)
    b36 = b36.at[0, 0].set(p["b3"][0, 0]).at[0, 1].set(p["b6"][0, 0])

    # One packed (1, 1920) f32 bias input (offsets 0 / 1024 / 1408 / 1792,
    # all multiples of 128 -> lane-aligned slices in the kernel).
    bias = jnp.concatenate([b14, b2, b5, b36], axis=1)
    assert bias.shape == (1, BIAS_W)

    return {
        "wx14": wx.astype(bf16), "wu14": wu.astype(bf16),
        "w2": w2.astype(bf16), "w5": w5.astype(bf16),
        "w3": w3.astype(bf16), "w6": w6.astype(bf16),
        "bias": bias,
    }


# ----------------------------------------------------------------------------
# Pure-JAX reference (same bf16-weight / f32-accumulate numerics as the kernel)
# ----------------------------------------------------------------------------
def critic_ref(x, u, p):
    def lin(h, w, b):
        return jnp.dot(h.astype(jnp.bfloat16), w.astype(jnp.bfloat16),
                       preferred_element_type=jnp.float32) + b
    xu = jnp.concatenate([x, u], axis=1)
    h1 = jax.nn.relu(lin(xu, p["w1"], p["b1"]))
    h1 = jax.nn.relu(lin(h1, p["w2"], p["b2"]))
    q1 = lin(h1, p["w3"], p["b3"])
    h2 = jax.nn.relu(lin(xu, p["w4"], p["b4"]))
    h2 = jax.nn.relu(lin(h2, p["w5"], p["b5"]))
    q2 = lin(h2, p["w6"], p["b6"])
    return q1, q2


if __name__ == "__main__":
    # AntBulletEnv-v0: observation dim 28, action dim 8.
    state_dim, action_dim = 28, 8

    key = jax.random.PRNGKey(0)
    k_params, k_x, k_u = jax.random.split(key, 3)
    raw = init_raw_params(k_params, state_dim, action_dim)
    packed = pack_params(raw, state_dim, action_dim)

    fwd = jax.jit(critic_forward)

    # Small inference-style batch (single-block path).
    batch = 2
    x = jax.random.normal(k_x, (batch, state_dim), jnp.float32)
    u = jax.random.normal(k_u, (batch, action_dim), jnp.float32)
    q1, q2 = fwd(x, u, packed)
    jax.block_until_ready((q1, q2))
    r1, r2 = critic_ref(x, u, raw)
    assert q1.shape == (batch, 1) and q2.shape == (batch, 1)
    assert jnp.allclose(q1, r1, atol=5e-3, rtol=5e-3)
    assert jnp.allclose(q2, r2, atol=5e-3, rtol=5e-3)

    # Ragged mid-size batch (2-step parallel grid + wrapper padding path).
    batch2 = 300
    k_x2, k_u2 = jax.random.split(jax.random.PRNGKey(1))
    x2 = jax.random.normal(k_x2, (batch2, state_dim), jnp.float32)
    u2 = jax.random.normal(k_u2, (batch2, action_dim), jnp.float32)
    q1b, q2b = fwd(x2, u2, packed)
    jax.block_until_ready((q1b, q2b))
    r1b, r2b = critic_ref(x2, u2, raw)
    assert q1b.shape == (batch2, 1) and q2b.shape == (batch2, 1)
    assert jnp.allclose(q1b, r1b, atol=5e-3, rtol=5e-3)
    assert jnp.allclose(q2b, r2b, atol=5e-3, rtol=5e-3)

    print("KERNEL_OK")
</pallas_src>

<mosaic_0001>
module attributes {stable_mosaic.version = 11 : i64} {
  func.func @critic_kernel(%arg0: i32, %arg1: memref<8x28xf32, #tpu.memory_space<vmem>>, %arg2: memref<8x8xf32, #tpu.memory_space<vmem>>, %arg3: memref<28x1024xbf16, #tpu.memory_space<vmem>>, %arg4: memref<8x1024xbf16, #tpu.memory_space<vmem>>, %arg5: memref<512x384xbf16, #tpu.memory_space<vmem>>, %arg6: memref<512x384xbf16, #tpu.memory_space<vmem>>, %arg7: memref<384x128xbf16, #tpu.memory_space<vmem>>, %arg8: memref<384x128xbf16, #tpu.memory_space<vmem>>, %arg9: memref<1x1920xf32, #tpu.memory_space<vmem>>, %arg10: memref<8x128xf32, #tpu.memory_space<vmem>>) attributes {dimension_semantics = [#tpu.dimension_semantics<parallel>], iteration_bounds = array<i64: 1>, scalar_prefetch = 0 : i64, scratch_operands = 0 : i64, tpu.core_type = #tpu.core_type<tc>, window_params = [{transform_indices = @transform_0, window_bounds = array<i64: 8, 28>}, {transform_indices = @transform_1, window_bounds = array<i64: 8, 8>}, {pipeline_mode = #tpu.pipeline_mode<synchronous>, transform_indices = @transform_2, window_bounds = array<i64: 28, 1024>}, {pipeline_mode = #tpu.pipeline_mode<synchronous>, transform_indices = @transform_3, window_bounds = array<i64: 8, 1024>}, {pipeline_mode = #tpu.pipeline_mode<synchronous>, transform_indices = @transform_4, window_bounds = array<i64: 512, 384>}, {pipeline_mode = #tpu.pipeline_mode<synchronous>, transform_indices = @transform_5, window_bounds = array<i64: 512, 384>}, {pipeline_mode = #tpu.pipeline_mode<synchronous>, transform_indices = @transform_6, window_bounds = array<i64: 384, 128>}, {pipeline_mode = #tpu.pipeline_mode<synchronous>, transform_indices = @transform_7, window_bounds = array<i64: 384, 128>}, {pipeline_mode = #tpu.pipeline_mode<synchronous>, transform_indices = @transform_8, window_bounds = array<i64: 1, 1920>}, {transform_indices = @transform_9, window_bounds = array<i64: 8, 128>}]} {
    %c0 = arith.constant 0 : index
    %c0_0 = arith.constant 0 : index
    %0 = vector.load %arg1[%c0, %c0_0] : memref<8x28xf32, #tpu.memory_space<vmem>>, vector<8x28xf32>
    %1 = arith.truncf %0 : vector<8x28xf32> to vector<8x28xbf16>
    %c0_1 = arith.constant 0 : index
    %c0_2 = arith.constant 0 : index
    %2 = vector.load %arg2[%c0_1, %c0_2] : memref<8x8xf32, #tpu.memory_space<vmem>>, vector<8x8xf32>
    %3 = arith.truncf %2 : vector<8x8xf32> to vector<8x8xbf16>
    %c0_3 = arith.constant 0 : index
    %c0_4 = arith.constant 0 : index
    %4 = vector.load %arg9[%c0_3, %c0_4] : memref<1x1920xf32, #tpu.memory_space<vmem>>, vector<1x1024xf32>
    %c0_5 = arith.constant 0 : index
    %c1024 = arith.constant 1024 : index
    %5 = vector.load %arg9[%c0_5, %c1024] : memref<1x1920xf32, #tpu.memory_space<vmem>>, vector<1x384xf32>
    %c0_6 = arith.constant 0 : index
    %c1408 = arith.constant 1408 : index
    %6 = vector.load %arg9[%c0_6, %c1408] : memref<1x1920xf32, #tpu.memory_space<vmem>>, vector<1x384xf32>
    %c0_7 = arith.constant 0 : index
    %c1792 = arith.constant 1792 : index
    %7 = vector.load %arg9[%c0_7, %c1792] : memref<1x1920xf32, #tpu.memory_space<vmem>>, vector<1x128xf32>
    %c0_8 = arith.constant 0 : index
    %c0_9 = arith.constant 0 : index
    %8 = vector.load %arg3[%c0_8, %c0_9] : memref<28x1024xbf16, #tpu.memory_space<vmem>>, vector<28x1024xbf16>
    %cst = arith.constant dense<0.000000e+00> : vector<8x1024xf32>
    %9 = tpu.matmul %1, %8, %cst {dimension_numbers = #tpu.dot_dimension_numbers<[1], [0], [0], [1], [0, 0, 1, 1], [], []>} : vector<8x28xbf16>, vector<28x1024xbf16>, vector<8x1024xf32> -> vector<8x1024xf32>
    %c0_10 = arith.constant 0 : index
    %c0_11 = arith.constant 0 : index
    %10 = vector.load %arg4[%c0_10, %c0_11] : memref<8x1024xbf16, #tpu.memory_space<vmem>>, vector<8x1024xbf16>
    %cst_12 = arith.constant dense<0.000000e+00> : vector<8x1024xf32>
    %11 = tpu.matmul %3, %10, %cst_12 {dimension_numbers = #tpu.dot_dimension_numbers<[1], [0], [0], [1], [0, 0, 1, 1], [], []>} : vector<8x8xbf16>, vector<8x1024xbf16>, vector<8x1024xf32> -> vector<8x1024xf32>
    %12 = arith.addf %9, %11 : vector<8x1024xf32>
    %13 = vector.broadcast %4 : vector<1x1024xf32> to vector<8x1024xf32>
    %14 = arith.addf %12, %13 : vector<8x1024xf32>
    %cst_13 = arith.constant 0.000000e+00 : f32
    %15 = vector.broadcast %cst_13 : f32 to vector<8x1024xf32>
    %16 = arith.maximumf %14, %15 : vector<8x1024xf32>
    %17 = arith.truncf %16 : vector<8x1024xf32> to vector<8x1024xbf16>
    %18 = vector.extract_strided_slice %17 {offsets = [0, 0], sizes = [8, 512], strides = [1, 1]} : vector<8x1024xbf16> to vector<8x512xbf16>
    %19 = vector.extract_strided_slice %17 {offsets = [0, 512], sizes = [8, 512], strides = [1, 1]} : vector<8x1024xbf16> to vector<8x512xbf16>
    %c0_14 = arith.constant 0 : index
    %c0_15 = arith.constant 0 : index
    %20 = vector.load %arg5[%c0_14, %c0_15] : memref<512x384xbf16, #tpu.memory_space<vmem>>, vector<512x384xbf16>
    %cst_16 = arith.constant dense<0.000000e+00> : vector<8x384xf32>
    %21 = tpu.matmul %18, %20, %cst_16 {dimension_numbers = #tpu.dot_dimension_numbers<[1], [0], [0], [1], [0, 0, 1, 1], [], []>} : vector<8x512xbf16>, vector<512x384xbf16>, vector<8x384xf32> -> vector<8x384xf32>
    %22 = vector.broadcast %5 : vector<1x384xf32> to vector<8x384xf32>
    %23 = arith.addf %21, %22 : vector<8x384xf32>
    %cst_17 = arith.constant 0.000000e+00 : f32
    %24 = vector.broadcast %cst_17 : f32 to vector<8x384xf32>
    %25 = arith.maximumf %23, %24 : vector<8x384xf32>
    %26 = arith.truncf %25 : vector<8x384xf32> to vector<8x384xbf16>
    %c0_18 = arith.constant 0 : index
    %c0_19 = arith.constant 0 : index
    %27 = vector.load %arg6[%c0_18, %c0_19] : memref<512x384xbf16, #tpu.memory_space<vmem>>, vector<512x384xbf16>
    %cst_20 = arith.constant dense<0.000000e+00> : vector<8x384xf32>
    %28 = tpu.matmul %19, %27, %cst_20 {dimension_numbers = #tpu.dot_dimension_numbers<[1], [0], [0], [1], [0, 0, 1, 1], [], []>} : vector<8x512xbf16>, vector<512x384xbf16>, vector<8x384xf32> -> vector<8x384xf32>
    %29 = vector.broadcast %6 : vector<1x384xf32> to vector<8x384xf32>
    %30 = arith.addf %28, %29 : vector<8x384xf32>
    %cst_21 = arith.constant 0.000000e+00 : f32
    %31 = vector.broadcast %cst_21 : f32 to vector<8x384xf32>
    %32 = arith.maximumf %30, %31 : vector<8x384xf32>
    %33 = arith.truncf %32 : vector<8x384xf32> to vector<8x384xbf16>
    %c0_22 = arith.constant 0 : index
    %c0_23 = arith.constant 0 : index
    %34 = vector.load %arg7[%c0_22, %c0_23] : memref<384x128xbf16, #tpu.memory_space<vmem>>, vector<384x128xbf16>
    %cst_24 = arith.constant dense<0.000000e+00> : vector<8x128xf32>
    %35 = tpu.matmul %26, %34, %cst_24 {dimension_numbers = #tpu.dot_dimension_numbers<[1], [0], [0], [1], [0, 0, 1, 1], [], []>} : vector<8x384xbf16>, vector<384x128xbf16>, vector<8x128xf32> -> vector<8x128xf32>
    %c0_25 = arith.constant 0 : index
    %c0_26 = arith.constant 0 : index
    %36 = vector.load %arg8[%c0_25, %c0_26] : memref<384x128xbf16, #tpu.memory_space<vmem>>, vector<384x128xbf16>
    %cst_27 = arith.constant dense<0.000000e+00> : vector<8x128xf32>
    %37 = tpu.matmul %33, %36, %cst_27 {dimension_numbers = #tpu.dot_dimension_numbers<[1], [0], [0], [1], [0, 0, 1, 1], [], []>} : vector<8x384xbf16>, vector<384x128xbf16>, vector<8x128xf32> -> vector<8x128xf32>
    %38 = arith.addf %35, %37 : vector<8x128xf32>
    %39 = vector.broadcast %7 : vector<1x128xf32> to vector<8x128xf32>
    %40 = arith.addf %38, %39 : vector<8x128xf32>
    %c0_28 = arith.constant 0 : index
    %c0_29 = arith.constant 0 : index
    %41 = vector.load %arg10[%c0_28, %c0_29] : memref<8x128xf32, #tpu.memory_space<vmem>>, vector<8x128xf32>
    tpu.vector_store %arg10[%c0_28, %c0_29], %40 {strides = array<i32>} : memref<8x128xf32, #tpu.memory_space<vmem>>, vector<8x128xf32>,
    return
  }
  func.func @transform_0(%arg0: i32) -> (i32, i32) {
    %c0_i32 = arith.constant 0 : i32
    %c0_i32_0 = arith.constant 0 : i32
    return %arg0, %c0_i32 : i32, i32
  }
  func.func @transform_1(%arg0: i32) -> (i32, i32) {
    %c0_i32 = arith.constant 0 : i32
    %c0_i32_0 = arith.constant 0 : i32
    return %arg0, %c0_i32 : i32, i32
  }
  func.func @transform_2(%arg0: i32) -> (i32, i32) {
    %c0_i32 = arith.constant 0 : i32
    %c0_i32_0 = arith.constant 0 : i32
    %c0_i32_1 = arith.constant 0 : i32
    return %c0_i32, %c0_i32_0 : i32, i32
  }
  func.func @transform_3(%arg0: i32) -> (i32, i32) {
    %c0_i32 = arith.constant 0 : i32
    %c0_i32_0 = arith.constant 0 : i32
    %c0_i32_1 = arith.constant 0 : i32
    return %c0_i32, %c0_i32_0 : i32, i32
  }
  func.func @transform_4(%arg0: i32) -> (i32, i32) {
    %c0_i32 = arith.constant 0 : i32
    %c0_i32_0 = arith.constant 0 : i32
    %c0_i32_1 = arith.constant 0 : i32
    return %c0_i32, %c0_i32_0 : i32, i32
  }
  func.func @transform_5(%arg0: i32) -> (i32, i32) {
    %c0_i32 = arith.constant 0 : i32
    %c0_i32_0 = arith.constant 0 : i32
    %c0_i32_1 = arith.constant 0 : i32
    return %c0_i32, %c0_i32_0 : i32, i32
  }
  func.func @transform_6(%arg0: i32) -> (i32, i32) {
    %c0_i32 = arith.constant 0 : i32
    %c0_i32_0 = arith.constant 0 : i32
    %c0_i32_1 = arith.constant 0 : i32
    return %c0_i32, %c0_i32_0 : i32, i32
  }
  func.func @transform_7(%arg0: i32) -> (i32, i32) {
    %c0_i32 = arith.constant 0 : i32
    %c0_i32_0 = arith.constant 0 : i32
    %c0_i32_1 = arith.constant 0 : i32
    return %c0_i32, %c0_i32_0 : i32, i32
  }
  func.func @transform_8(%arg0: i32) -> (i32, i32) {
    %c0_i32 = arith.constant 0 : i32
    %c0_i32_0 = arith.constant 0 : i32
    %c0_i32_1 = arith.constant 0 : i32
    return %c0_i32, %c0_i32_0 : i32, i32
  }
  func.func @transform_9(%arg0: i32) -> (i32, i32) {
    %c0_i32 = arith.constant 0 : i32
    %c0_i32_0 = arith.constant 0 : i32
    return %arg0, %c0_i32 : i32, i32
  }
}

</mosaic_0001>

<llo_original>
// kernel: critic_forward.1
$region0: #{critic_forward.1}
  #allocation0 [shape = 'u32[]', space=smem, size = 0x4, offset = 0x4, fixed_abs, tag = 'smem constant byte address 0x4 - core index']
  #allocation1 [shape = 'u32[144,128]{1,0:T(1,128)}', space=vmem, size = 0x12000, scoped, tag = 'internal scratch']
  %s0 = inlined_call_operand.vmem [shape: f32[8,28], index: 0, kind: input, shape index: {}]
  %s1 = inlined_call_operand.vmem [shape: f32[8,8], index: 1, kind: input, shape index: {}]
  %s2 = inlined_call_operand.hbm [shape: bf16[28,1024], index: 2, kind: input, shape index: {}]
  %s3 = inlined_call_operand.vmem [shape: bf16[8,1024], index: 3, kind: input, shape index: {}]
  %s4 = inlined_call_operand.hbm [shape: bf16[512,384], index: 4, kind: input, shape index: {}]
  %s5 = inlined_call_operand.hbm [shape: bf16[512,384], index: 5, kind: input, shape index: {}]
  %s6 = inlined_call_operand.hbm [shape: bf16[384,128], index: 6, kind: input, shape index: {}]
  %s7 = inlined_call_operand.hbm [shape: bf16[384,128], index: 7, kind: input, shape index: {}]
  %s8 = inlined_call_operand.vmem [shape: f32[1,1920], index: 8, kind: input, shape index: {}]
  %s9 = inlined_call_operand.vmem [shape: f32[8,128], index: 9, kind: output, shape index: {}]
  %s10 = sld [smem:[#allocation0]]
  $region66: #{critic_forward.1} parent=0
    _
  %s12 = ssub.s32 1, %s10
  %s13 = scalar_select 0, %s12, %s10
  $region1: #{critic_forward.1} parent=0
    #allocation2 [shape = 'u8[65536]{0}', space=vmem, size = 0x10000, scoped, tag = 'input window, operand 2, single buffered']
    #allocation3 [shape = 's32[1]{0}', space=sflag, size = 0x4, scoped, tag = 'scoped memory for critic_forward.1']
    #allocation4 [shape = 'u8[393216]{0}', space=vmem, size = 0x60000, scoped, tag = 'input window, operand 4, single buffered']
    #allocation5 [shape = 's32[1]{0}', space=sflag, size = 0x4, scoped, tag = 'scoped memory for critic_forward.1']
    #allocation6 [shape = 'u8[393216]{0}', space=vmem, size = 0x60000, scoped, tag = 'input window, operand 5, single buffered']
    #allocation7 [shape = 'u8[98304]{0}', space=vmem, size = 0x18000, scoped, tag = 'input window, operand 6, single buffered']
    #allocation8 [shape = 's32[1]{0}', space=sflag, size = 0x4, scoped, tag = 'scoped memory for critic_forward.1']
    #allocation9 [shape = 'u8[98304]{0}', space=vmem, size = 0x18000, scoped, tag = 'input window, operand 7, single buffered']
    %14 = vsyncpa [#allocation3], 0
    %15 = vsyncpa [#allocation5], 0
    %16 = vsyncpa [#allocation8], 0
    // Predicated region
    $region2: #{critic_forward.1} parent=1 // pred_check
      _
    $region3: #{critic_forward.1} parent=1 // pred_check_branch
      %18 = sbr.rel (0) target = $region5
    $region4: #{critic_forward.1} parent=1 // pred_region
      _
    $region5: #{critic_forward.1} parent=1 // pred_fallthru
      _
    // Predicated region
    $region6: #{critic_forward.1} parent=1 // pred_check
      _
    $region7: #{critic_forward.1} parent=1 // pred_check_branch
      %20 = sbr.rel (0) target = $region9
    $region8: #{critic_forward.1} parent=1 // pred_region
      _
    $region9: #{critic_forward.1} parent=1 // pred_fallthru
      _
    // Predicated region
    $region10: #{critic_forward.1} parent=1 // pred_check
      _
    $region11: #{critic_forward.1} parent=1 // pred_check_branch
      %22 = sbr.rel (0) target = $region13
    $region12: #{critic_forward.1} parent=1 // pred_region
      %s24 = ssub.s32 2048, 2048
      %25 = vsyncadd [#allocation3], %s24
      %s26 = sshll.u32 [#allocation2], 4
      %s27 = int_to_ptr.vmem [resolvable:$true] %s26
      %32 = dma.hbm_to_vmem [thread:$0]  %s2, 2048, %s27, [#allocation3], 512, 512, 32
    $region13: #{critic_forward.1} parent=1 // pred_fallthru
      _
    // Predicated region
    $region14: #{critic_forward.1} parent=1 // pred_check
      _
    $region15: #{critic_forward.1} parent=1 // pred_check_branch
      %34 = sbr.rel (0) target = $region17
    $region16: #{critic_forward.1} parent=1 // pred_region
      _
    $region17: #{critic_forward.1} parent=1 // pred_fallthru
      _
    // Predicated region
    $region18: #{critic_forward.1} parent=1 // pred_check
      _
    $region19: #{critic_forward.1} parent=1 // pred_check_branch
      %36 = sbr.rel (0) target = $region21
    $region20: #{critic_forward.1} parent=1 // pred_region
      %s38 = ssub.s32 12288, 12288
      %39 = vsyncadd [#allocation5], %s38
      %s40 = sshll.u32 [#allocation4], 4
      %s41 = int_to_ptr.vmem [resolvable:$true] %s40
      %46 = dma.hbm_to_vmem [thread:$0]  %s4, 12288, %s41, [#allocation5], 192, 192, 12
    $region21: #{critic_forward.1} parent=1 // pred_fallthru
      _
    // Predicated region
    $region22: #{critic_forward.1} parent=1 // pred_check
      _
    $region23: #{critic_forward.1} parent=1 // pred_check_branch
      %48 = sbr.rel (0) target = $region25
    $region24: #{critic_forward.1} parent=1 // pred_region
      %s50 = ssub.s32 12288, 12288
      %51 = vsyncadd [#allocation5], %s50
      %s52 = sshll.u32 [#allocation6], 4
      %s53 = int_to_ptr.vmem [resolvable:$true] %s52
      %58 = dma.hbm_to_vmem [thread:$0]  %s5, 12288, %s53, [#allocation5], 192, 192, 12
    $region25: #{critic_forward.1} parent=1 // pred_fallthru
      _
    // Predicated region
    $region26: #{critic_forward.1} parent=1 // pred_check
      _
    $region27: #{critic_forward.1} parent=1 // pred_check_branch
      %60 = sbr.rel (0) target = $region29
    $region28: #{critic_forward.1} parent=1 // pred_region
      %s62 = ssub.s32 3072, 3072
      %63 = vsyncadd [#allocation8], %s62
      %s64 = sshll.u32 [#allocation7], 4
      %s65 = int_to_ptr.vmem [resolvable:$true] %s64
      %70 = dma.hbm_to_vmem [thread:$0]  %s6, 3072, %s65, [#allocation8], 64, 64, 4
    $region29: #{critic_forward.1} parent=1 // pred_fallthru
      _
    // Predicated region
    $region30: #{critic_forward.1} parent=1 // pred_check
      _
    $region31: #{critic_forward.1} parent=1 // pred_check_branch
      %72 = sbr.rel (0) target = $region33
    $region32: #{critic_forward.1} parent=1 // pred_region
      %s74 = ssub.s32 3072, 3072
      %75 = vsyncadd [#allocation8], %s74
      %s76 = sshll.u32 [#allocation9], 4
      %s77 = int_to_ptr.vmem [resolvable:$true] %s76
      %82 = dma.hbm_to_vmem [thread:$0]  %s7, 3072, %s77, [#allocation8], 64, 64, 4
    $region33: #{critic_forward.1} parent=1 // pred_fallthru
      _
    // Predicated region
    $region34: #{critic_forward.1} parent=1 // pred_check
      _
    $region35: #{critic_forward.1} parent=1 // pred_check_branch
      %84 = sbr.rel (0) target = $region37
    $region36: #{critic_forward.1} parent=1 // pred_region
      _
    $region37: #{critic_forward.1} parent=1 // pred_fallthru
      _
    // Predicated region
    $region38: #{critic_forward.1} parent=1 // pred_check
      _
    $region39: #{critic_forward.1} parent=1 // pred_check_branch
      %86 = sbr.rel (0) target = $region41
    $region40: #{critic_forward.1} parent=1 // pred_region
      %87 = dma.done [#allocation3], 2048
    $region41: #{critic_forward.1} parent=1 // pred_fallthru
      _
    // Predicated region
    $region42: #{critic_forward.1} parent=1 // pred_check
      _
    $region43: #{critic_forward.1} parent=1 // pred_check_branch
      %89 = sbr.rel (0) target = $region45
    $region44: #{critic_forward.1} parent=1 // pred_region
      %90 = dma.done [#allocation5], 12288
    $region45: #{critic_forward.1} parent=1 // pred_fallthru
      _
    // Predicated region
    $region46: #{critic_forward.1} parent=1 // pred_check
      _
    $region47: #{critic_forward.1} parent=1 // pred_check_branch
      %92 = sbr.rel (0) target = $region49
    $region48: #{critic_forward.1} parent=1 // pred_region
      %93 = dma.done [#allocation5], 12288
    $region49: #{critic_forward.1} parent=1 // pred_fallthru
      _
    // Predicated region
    $region50: #{critic_forward.1} parent=1 // pred_check
      _
    $region51: #{critic_forward.1} parent=1 // pred_check_branch
      %95 = sbr.rel (0) target = $region53
    $region52: #{critic_forward.1} parent=1 // pred_region
      %96 = dma.done [#allocation8], 3072
    $region53: #{critic_forward.1} parent=1 // pred_fallthru
      _
    // Predicated region
    $region54: #{critic_forward.1} parent=1 // pred_check
      _
    $region55: #{critic_forward.1} parent=1 // pred_check_branch
      %98 = sbr.rel (0) target = $region57
    $region56: #{critic_forward.1} parent=1 // pred_region
      %99 = dma.done [#allocation8], 3072
    $region57: #{critic_forward.1} parent=1 // pred_fallthru
      _
    %v101 = vld [vmem:[%s0] sm:$0xff]
    %v102 = vpack.c.bf16 %v101, %v101
    %v103 = vld [vmem:[%s1] sm:$0xff]
    %v104 = vpack.c.bf16 %v103, %v103
    %v105 = vld [vmem:[%s8] sm:$0xff]
    %v106 = vld [vmem:[%s8 + $0x8] sm:$0x7]
    %v107 = vld [vmem:[%s8 + $0xb] sm:$0x7]
    %v108 = vld [vmem:[%s8 + $0xe] sm:$0x1]
    %v109 = vld [vmem:[#allocation2] sm:$0xff]
    %v110 = vld [vmem:[#allocation2 + $0x8] sm:$0xff]
    %v111 = vld [vmem:[#allocation2 + $0x10] sm:$0xff]
    %v112 = vld [vmem:[#allocation2 + $0x18] sm:$0xff]
    %v113 = vld [vmem:[#allocation2 + $0x20] sm:$0xff]
    %v114 = vld [vmem:[#allocation2 + $0x28] sm:$0xff]
    %v115 = vld [vmem:[#allocation2 + $0x30] sm:$0xff]
    %v116 = vld [vmem:[#allocation2 + $0x38] sm:$0xff]
    %v117 = vld [vmem:[#allocation2 + $0x40] sm:$0xff]
    %v118 = vld [vmem:[#allocation2 + $0x48] sm:$0xff]
    %v119 = vld [vmem:[#allocation2 + $0x50] sm:$0xff]
    %v120 = vld [vmem:[#allocation2 + $0x58] sm:$0xff]
    %v121 = vld [vmem:[#allocation2 + $0x60] sm:$0x33]
    %v122 = vld [vmem:[#allocation2 + $0x68] sm:$0x33]
    %v123 = vld [vmem:[#allocation2 + $0x70] sm:$0x33]
    %v124 = vld [vmem:[#allocation2 + $0x78] sm:$0x33]
    %v125 = vld [vmem:[%s3] sm:$0xff]
    %v126 = vld [vmem:[%s3 + $0x8] sm:$0xff]
    %v127 = vld [vmem:[%s3 + $0x10] sm:$0xff]
    %v128 = vld [vmem:[%s3 + $0x18] sm:$0xff]
    %v133 = vunpack.c.l.b16 %v125
    %v134 = vunpack.c.h.b16 %v125
    %v135 = vunpack.c.l.b16 %v126
    %v136 = vunpack.c.h.b16 %v126
    %v137 = vunpack.c.l.b16 %v127
    %v138 = vunpack.c.h.b16 %v127
    %v139 = vunpack.c.l.b16 %v128
    %v140 = vunpack.c.h.b16 %v128
    %v141 = vpack.c.b16 %v133, %v133
    %v142 = vpack.c.b16 %v134, %v134
    %v143 = vpack.c.b16 %v135, %v135
    %v144 = vpack.c.b16 %v136, %v136
    %v145 = vpack.c.b16 %v137, %v137
    %v146 = vpack.c.b16 %v138, %v138
    %v147 = vpack.c.b16 %v139, %v139
    %v148 = vpack.c.b16 %v140, %v140
    %vm149 = vcmask 64512
    %v151 = vsel %vm149, %v104, 0
    %vm153 = vcmask 1043456
    %v155 = vsel %vm153, %v141, 0
    %v158 = vsel %vm153, %v142, 0
    %v161 = vsel %vm153, %v143, 0
    %v164 = vsel %vm153, %v144, 0
    %v167 = vsel %vm153, %v145, 0
    %v170 = vsel %vm153, %v146, 0
    %v173 = vsel %vm153, %v147, 0
    %v176 = vsel %vm153, %v148, 0
    %178 = vmatprep.subr.bf16.mxu0 %v158
    %179 = vmatpush1.bf16.msra.mxu0 %v155
    %180 = vmatprep.subr.bf16.mxu0 0
    %181 = vmatpush1.bf16.msra.mxu0 0
    %182 = vmatprep.subr.bf16.mxu0 0
    %183 = vmatpush1.bf16.msra.mxu0 0
    %184 = vmatprep.subr.bf16.mxu0 0
    %185 = vmatpush1.bf16.msra.mxu0 0
    %186 = vmatprep.subr.bf16.mxu0 0
    %187 = vmatpush1.bf16.msra.mxu0 0
    %188 = vmatprep.subr.bf16.mxu0 0
    %189 = vmatpush1.bf16.msra.mxu0 0
    %190 = vmatprep.subr.bf16.mxu0 0
    %191 = vmatpush1.bf16.msra.mxu0 0
    %192 = vmatprep.subr.bf16.mxu0 0
    %193 = vmatpush1.bf16.msra.mxu0 0
    %194 = vmatprep.subr.bf16.mxu0 0
    %195 = vmatpush1.bf16.msra.mxu0 0
    %196 = vmatprep.subr.bf16.mxu0 0
    %197 = vmatpush1.bf16.msra.mxu0 0
    %198 = vmatprep.subr.bf16.mxu0 0
    %199 = vmatpush1.bf16.msra.mxu0 0
    %200 = vmatprep.subr.bf16.mxu0 0
    %201 = vmatpush1.bf16.msra.mxu0 0
    %202 = vmatprep.subr.bf16.mxu0 0
    %203 = vmatpush1.bf16.msra.mxu0 0
    %204 = vmatprep.subr.bf16.mxu0 0
    %205 = vmatpush1.bf16.msra.mxu0 0
    %206 = vmatprep.subr.bf16.mxu0 0
    %207 = vmatpush1.bf16.msra.mxu0 0
    %208 = vmatprep.subr.bf16.mxu0 0
    %209 = vmatpush1.bf16.msra.mxu0 0
    %210 = vmatprep.mubr.bf16.mxu0 0
    %211 = vmatmul.mubr.bf16.gmra.mrb[0].mxu0 %v151
    %v212 = vpop.f32.mrb[0].mxu0
    %v213 = vadd.f32 0.0, %v212
    %v214 = vpop.f32.mrb[0].mxu0
    %v215 = vadd.f32 0.0, %v214
    %v216 = vpop.f32.mrb[0].mxu0
    %v217 = vpop.f32.mrb[0].mxu0
    %218 = vdwg.mxu0
    %219 = vmatprep.subr.bf16.mxu0 %v164
    %220 = vmatpush1.bf16.msra.mxu0 %v161
    %221 = vmatprep.subr.bf16.mxu0 0
    %222 = vmatpush1.bf16.msra.mxu0 0
    %223 = vmatprep.subr.bf16.mxu0 0
    %224 = vmatpush1.bf16.msra.mxu0 0
    %225 = vmatprep.subr.bf16.mxu0 0
    %226 = vmatpush1.bf16.msra.mxu0 0
    %227 = vmatprep.subr.bf16.mxu0 0
    %228 = vmatpush1.bf16.msra.mxu0 0
    %229 = vmatprep.subr.bf16.mxu0 0
    %230 = vmatpush1.bf16.msra.mxu0 0
    %231 = vmatprep.subr.bf16.mxu0 0
    %232 = vmatpush1.bf16.msra.mxu0 0
    %233 = vmatprep.subr.bf16.mxu0 0
    %234 = vmatpush1.bf16.msra.mxu0 0
    %235 = vmatprep.subr.bf16.mxu0 0
    %236 = vmatpush1.bf16.msra.mxu0 0
    %237 = vmatprep.subr.bf16.mxu0 0
    %238 = vmatpush1.bf16.msra.mxu0 0
    %239 = vmatprep.subr.bf16.mxu0 0
    %240 = vmatpush1.bf16.msra.mxu0 0
    %241 = vmatprep.subr.bf16.mxu0 0
    %242 = vmatpush1.bf16.msra.mxu0 0
    %243 = vmatprep.subr.bf16.mxu0 0
    %244 = vmatpush1.bf16.msra.mxu0 0
    %245 = vmatprep.subr.bf16.mxu0 0
    %246 = vmatpush1.bf16.msra.mxu0 0
    %247 = vmatprep.subr.bf16.mxu0 0
    %248 = vmatpush1.bf16.msra.mxu0 0
    %249 = vmatprep.subr.bf16.mxu0 0
    %250 = vmatpush1.bf16.msra.mxu0 0
    %251 = vmatprep.mubr.bf16.mxu0 0
    %252 = vmatmul.mubr.bf16.gmra.mrb[0].mxu0 %v151
    %v253 = vpop.f32.mrb[0].mxu0
    %v254 = vadd.f32 0.0, %v253
    %v255 = vpop.f32.mrb[0].mxu0
    %v256 = vadd.f32 0.0, %v255
    %v257 = vpop.f32.mrb[0].mxu0
    %v258 = vpop.f32.mrb[0].mxu0
    %259 = vdwg.mxu0
    %260 = vmatprep.subr.bf16.mxu0 %v170
    %261 = vmatpush1.bf16.msra.mxu0 %v167
    %262 = vmatprep.subr.bf16.mxu0 0
    %263 = vmatpush1.bf16.msra.mxu0 0
    %264 = vmatprep.subr.bf16.mxu0 0
    %265 = vmatpush1.bf16.msra.mxu0 0
    %266 = vmatprep.subr.bf16.mxu0 0
    %267 = vmatpush1.bf16.msra.mxu0 0
    %268 = vmatprep.subr.bf16.mxu0 0
    %269 = vmatpush1.bf16.msra.mxu0 0
    %270 = vmatprep.subr.bf16.mxu0 0
    %271 = vmatpush1.bf16.msra.mxu0 0
    %272 = vmatprep.subr.bf16.mxu0 0
    %273 = vmatpush1.bf16.msra.mxu0 0
    %274 = vmatprep.subr.bf16.mxu0 0
    %275 = vmatpush1.bf16.msra.mxu0 0
    %276 = vmatprep.subr.bf16.mxu0 0
    %277 = vmatpush1.bf16.msra.mxu0 0
    %278 = vmatprep.subr.bf16.mxu0 0
    %279 = vmatpush1.bf16.msra.mxu0 0
    %280 = vmatprep.subr.bf16.mxu0 0
    %281 = vmatpush1.bf16.msra.mxu0 0
    %282 = vmatprep.subr.bf16.mxu0 0
    %283 = vmatpush1.bf16.msra.mxu0 0
    %284 = vmatprep.subr.bf16.mxu0 0
    %285 = vmatpush1.bf16.msra.mxu0 0
    %286 = vmatprep.subr.bf16.mxu0 0
    %287 = vmatpush1.bf16.msra.mxu0 0
    %288 = vmatprep.subr.bf16.mxu0 0
    %289 = vmatpush1.bf16.msra.mxu0 0
    %290 = vmatprep.subr.bf16.mxu0 0
    %291 = vmatpush1.bf16.msra.mxu0 0
    %292 = vmatprep.mubr.bf16.mxu0 0
    %293 = vmatmul.mubr.bf16.gmra.mrb[0].mxu0 %v151
    %v294 = vpop.f32.mrb[0].mxu0
    %v295 = vadd.f32 0.0, %v294
    %v296 = vpop.f32.mrb[0].mxu0
    %v297 = vadd.f32 0.0, %v296
    %v298 = vpop.f32.mrb[0].mxu0
    %v299 = vpop.f32.mrb[0].mxu0
    %300 = vdwg.mxu0
    %301 = vmatprep.subr.bf16.mxu0 %v176
    %302 = vmatpush1.bf16.msra.mxu0 %v173
    %303 = vmatprep.subr.bf16.mxu0 0
    %304 = vmatpush1.bf16.msra.mxu0 0
    %305 = vmatprep.subr.bf16.mxu0 0
    %306 = vmatpush1.bf16.msra.mxu0 0
    %307 = vmatprep.subr.bf16.mxu0 0
    %308 = vmatpush1.bf16.msra.mxu0 0
    %309 = vmatprep.subr.bf16.mxu0 0
    %310 = vmatpush1.bf16.msra.mxu0 0
    %311 = vmatprep.subr.bf16.mxu0 0
    %312 = vmatpush1.bf16.msra.mxu0 0
    %313 = vmatprep.subr.bf16.mxu0 0
    %314 = vmatpush1.bf16.msra.mxu0 0
    %315 = vmatprep.subr.bf16.mxu0 0
    %316 = vmatpush1.bf16.msra.mxu0 0
    %317 = vmatprep.subr.bf16.mxu0 0
    %318 = vmatpush1.bf16.msra.mxu0 0
    %319 = vmatprep.subr.bf16.mxu0 0
    %320 = vmatpush1.bf16.msra.mxu0 0
    %321 = vmatprep.subr.bf16.mxu0 0
    %322 = vmatpush1.bf16.msra.mxu0 0
    %323 = vmatprep.subr.bf16.mxu0 0
    %324 = vmatpush1.bf16.msra.mxu0 0
    %325 = vmatprep.subr.bf16.mxu0 0
    %326 = vmatpush1.bf16.msra.mxu0 0
    %327 = vmatprep.subr.bf16.mxu0 0
    %328 = vmatpush1.bf16.msra.mxu0 0
    %329 = vmatprep.subr.bf16.mxu0 0
    %330 = vmatpush1.bf16.msra.mxu0 0
    %331 = vmatprep.subr.bf16.mxu0 0
    %332 = vmatpush1.bf16.msra.mxu0 0
    %333 = vmatprep.mubr.bf16.mxu0 0
    %334 = vmatmul.mubr.bf16.gmra.mrb[0].mxu0 %v151
    %v335 = vpop.f32.mrb[0].mxu0
    %v336 = vadd.f32 0.0, %v335
    %v337 = vpop.f32.mrb[0].mxu0
    %v338 = vadd.f32 0.0, %v337
    %v339 = vpop.f32.mrb[0].mxu0
    %v340 = vpop.f32.mrb[0].mxu0
    %341 = vdwg.mxu0
    %v358 = vunpack.c.l.b16 %v109
    %v359 = vunpack.c.h.b16 %v109
    %v360 = vunpack.c.l.b16 %v110
    %v361 = vunpack.c.h.b16 %v110
    %v362 = vunpack.c.l.b16 %v111
    %v363 = vunpack.c.h.b16 %v111
    %v364 = vunpack.c.l.b16 %v112
    %v365 = vunpack.c.h.b16 %v112
    %v366 = vunpack.c.l.b16 %v113
    %v367 = vunpack.c.h.b16 %v113
    %v368 = vunpack.c.l.b16 %v114
    %v369 = vunpack.c.h.b16 %v114
    %v370 = vunpack.c.l.b16 %v115
    %v371 = vunpack.c.h.b16 %v115
    %v372 = vunpack.c.l.b16 %v116
    %v373 = vunpack.c.h.b16 %v116
    %v374 = vunpack.c.l.b16 %v117
    %v375 = vunpack.c.h.b16 %v117
    %v376 = vunpack.c.l.b16 %v118
    %v377 = vunpack.c.h.b16 %v118
    %v378 = vunpack.c.l.b16 %v119
    %v379 = vunpack.c.h.b16 %v119
    %v380 = vunpack.c.l.b16 %v120
    %v381 = vunpack.c.h.b16 %v120
    %v382 = vunpack.c.l.b16 %v121
    %v383 = vunpack.c.h.b16 %v121
    %v384 = vunpack.c.l.b16 %v122
    %v385 = vunpack.c.h.b16 %v122
    %v386 = vunpack.c.l.b16 %v123
    %v387 = vunpack.c.h.b16 %v123
    %v388 = vunpack.c.l.b16 %v124
    %v389 = vunpack.c.h.b16 %v124
    %v390 = vpack.c.b16 %v366, %v358
    %v391 = vpack.c.b16 %v367, %v359
    %v392 = vpack.c.b16 %v368, %v360
    %v393 = vpack.c.b16 %v369, %v361
    %v394 = vpack.c.b16 %v370, %v362
    %v395 = vpack.c.b16 %v371, %v363
    %v396 = vpack.c.b16 %v372, %v364
    %v397 = vpack.c.b16 %v373, %v365
    %v398 = vpack.c.b16 %v382, %v374
    %v399 = vpack.c.b16 %v383, %v375
    %v400 = vpack.c.b16 %v384, %v376
    %v401 = vpack.c.b16 %v385, %v377
    %v402 = vpack.c.b16 %v386, %v378
    %v403 = vpack.c.b16 %v387, %v379
    %v404 = vpack.c.b16 %v388, %v380
    %v405 = vpack.c.b16 %v389, %v381
    %vm414 = vcmask 228352
    %v416 = vsel %vm414, %v102, 0
    %vm418 = vcmask 1045504
    %v420 = vsel %vm418, %v398, 0
    %v423 = vsel %vm418, %v399, 0
    %v426 = vsel %vm418, %v400, 0
    %v429 = vsel %vm418, %v401, 0
    %v432 = vsel %vm418, %v402, 0
    %v435 = vsel %vm418, %v403, 0
    %v438 = vsel %vm418, %v404, 0
    %v441 = vsel %vm418, %v405, 0
    %443 = vmatprep.subr.bf16.mxu0 %v391
    %444 = vmatpush1.bf16.msra.mxu0 %v390
    %445 = vmatprep.subr.bf16.mxu0 %v423
    %446 = vmatpush1.bf16.msra.mxu0 %v420
    %447 = vmatprep.subr.bf16.mxu0 0
    %448 = vmatpush1.bf16.msra.mxu0 0
    %449 = vmatprep.subr.bf16.mxu0 0
    %450 = vmatpush1.bf16.msra.mxu0 0
    %451 = vmatprep.subr.bf16.mxu0 0
    %452 = vmatpush1.bf16.msra.mxu0 0
    %453 = vmatprep.subr.bf16.mxu0 0
    %454 = vmatpush1.bf16.msra.mxu0 0
    %455 = vmatprep.subr.bf16.mxu0 0
    %456 = vmatpush1.bf16.msra.mxu0 0
    %457 = vmatprep.subr.bf16.mxu0 0
    %458 = vmatpush1.bf16.msra.mxu0 0
    %459 = vmatprep.subr.bf16.mxu0 0
    %460 = vmatpush1.bf16.msra.mxu0 0
    %461 = vmatprep.subr.bf16.mxu0 0
    %462 = vmatpush1.bf16.msra.mxu0 0
    %463 = vmatprep.subr.bf16.mxu0 0
    %464 = vmatpush1.bf16.msra.mxu0 0
    %465 = vmatprep.subr.bf16.mxu0 0
    %466 = vmatpush1.bf16.msra.mxu0 0
    %467 = vmatprep.subr.bf16.mxu0 0
    %468 = vmatpush1.bf16.msra.mxu0 0
    %469 = vmatprep.subr.bf16.mxu0 0
    %470 = vmatpush1.bf16.msra.mxu0 0
    %471 = vmatprep.subr.bf16.mxu0 0
    %472 = vmatpush1.bf16.msra.mxu0 0
    %473 = vmatprep.subr.bf16.mxu0 0
    %474 = vmatpush1.bf16.msra.mxu0 0
    %475 = vmatprep.mubr.bf16.mxu0 0
    %476 = vmatmul.mubr.bf16.gmra.mrb[0].mxu0 %v416
    %v477 = vpop.f32.mrb[0].mxu0
    %v478 = vadd.f32 %v213, %v477
    %v479 = vpop.f32.mrb[0].mxu0
    %v480 = vadd.f32 %v215, %v479
    %v481 = vpop.f32.mrb[0].mxu0
    %v482 = vpop.f32.mrb[0].mxu0
    %483 = vdwg.mxu0
    %484 = vmatprep.subr.bf16.mxu0 %v393
    %485 = vmatpush1.bf16.msra.mxu0 %v392
    %486 = vmatprep.subr.bf16.mxu0 %v429
    %487 = vmatpush1.bf16.msra.mxu0 %v426
    %488 = vmatprep.subr.bf16.mxu0 0
    %489 = vmatpush1.bf16.msra.mxu0 0
    %490 = vmatprep.subr.bf16.mxu0 0
    %491 = vmatpush1.bf16.msra.mxu0 0
    %492 = vmatprep.subr.bf16.mxu0 0
    %493 = vmatpush1.bf16.msra.mxu0 0
    %494 = vmatprep.subr.bf16.mxu0 0
    %495 = vmatpush1.bf16.msra.mxu0 0
    %496 = vmatprep.subr.bf16.mxu0 0
    %497 = vmatpush1.bf16.msra.mxu0 0
    %498 = vmatprep.subr.bf16.mxu0 0
    %499 = vmatpush1.bf16.msra.mxu0 0
    %500 = vmatprep.subr.bf16.mxu0 0
    %501 = vmatpush1.bf16.msra.mxu0 0
    %502 = vmatprep.subr.bf16.mxu0 0
    %503 = vmatpush1.bf16.msra.mxu0 0
    %504 = vmatprep.subr.bf16.mxu0 0
    %505 = vmatpush1.bf16.msra.mxu0 0
    %506 = vmatprep.subr.bf16.mxu0 0
    %507 = vmatpush1.bf16.msra.mxu0 0
    %508 = vmatprep.subr.bf16.mxu0 0
    %509 = vmatpush1.bf16.msra.mxu0 0
    %510 = vmatprep.subr.bf16.mxu0 0
    %511 = vmatpush1.bf16.msra.mxu0 0
    %512 = vmatprep.subr.bf16.mxu0 0
    %513 = vmatpush1.bf16.msra.mxu0 0
    %514 = vmatprep.subr.bf16.mxu0 0
    %515 = vmatpush1.bf16.msra.mxu0 0
    %516 = vmatprep.mubr.bf16.mxu0 0
    %517 = vmatmul.mubr.bf16.gmra.mrb[0].mxu0 %v416
    %v518 = vpop.f32.mrb[0].mxu0
    %v519 = vadd.f32 %v254, %v518
    %v520 = vpop.f32.mrb[0].mxu0
    %v521 = vadd.f32 %v256, %v520
    %v522 = vpop.f32.mrb[0].mxu0
    %v523 = vpop.f32.mrb[0].mxu0
    %524 = vdwg.mxu0
    %525 = vmatprep.subr.bf16.mxu0 %v395
    %526 = vmatpush1.bf16.msra.mxu0 %v394
    %527 = vmatprep.subr.bf16.mxu0 %v435
    %528 = vmatpush1.bf16.msra.mxu0 %v432
    %529 = vmatprep.subr.bf16.mxu0 0
    %530 = vmatpush1.bf16.msra.mxu0 0
    %531 = vmatprep.subr.bf16.mxu0 0
    %532 = vmatpush1.bf16.msra.mxu0 0
    %533 = vmatprep.subr.bf16.mxu0 0
    %534 = vmatpush1.bf16.msra.mxu0 0
    %535 = vmatprep.subr.bf16.mxu0 0
    %536 = vmatpush1.bf16.msra.mxu0 0
    %537 = vmatprep.subr.bf16.mxu0 0
    %538 = vmatpush1.bf16.msra.mxu0 0
    %539 = vmatprep.subr.bf16.mxu0 0
    %540 = vmatpush1.bf16.msra.mxu0 0
    %541 = vmatprep.subr.bf16.mxu0 0
    %542 = vmatpush1.bf16.msra.mxu0 0
    %543 = vmatprep.subr.bf16.mxu0 0
    %544 = vmatpush1.bf16.msra.mxu0 0
    %545 = vmatprep.subr.bf16.mxu0 0
    %546 = vmatpush1.bf16.msra.mxu0 0
    %547 = vmatprep.subr.bf16.mxu0 0
    %548 = vmatpush1.bf16.msra.mxu0 0
    %549 = vmatprep.subr.bf16.mxu0 0
    %550 = vmatpush1.bf16.msra.mxu0 0
    %551 = vmatprep.subr.bf16.mxu0 0
    %552 = vmatpush1.bf16.msra.mxu0 0
    %553 = vmatprep.subr.bf16.mxu0 0
    %554 = vmatpush1.bf16.msra.mxu0 0
    %555 = vmatprep.subr.bf16.mxu0 0
    %556 = vmatpush1.bf16.msra.mxu0 0
    %557 = vmatprep.mubr.bf16.mxu0 0
    %558 = vmatmul.mubr.bf16.gmra.mrb[0].mxu0 %v416
    %v559 = vpop.f32.mrb[0].mxu0
    %v560 = vadd.f32 %v295, %v559
    %v561 = vpop.f32.mrb[0].mxu0
    %v562 = vadd.f32 %v297, %v561
    %v563 = vpop.f32.mrb[0].mxu0
    %v564 = vpop.f32.mrb[0].mxu0
    %565 = vdwg.mxu0
    %566 = vmatprep.subr.bf16.mxu0 %v397
    %567 = vmatpush1.bf16.msra.mxu0 %v396
    %568 = vmatprep.subr.bf16.mxu0 %v441
    %569 = vmatpush1.bf16.msra.mxu0 %v438
    %570 = vmatprep.subr.bf16.mxu0 0
    %571 = vmatpush1.bf16.msra.mxu0 0
    %572 = vmatprep.subr.bf16.mxu0 0
    %573 = vmatpush1.bf16.msra.mxu0 0
    %574 = vmatprep.subr.bf16.mxu0 0
    %575 = vmatpush1.bf16.msra.mxu0 0
    %576 = vmatprep.subr.bf16.mxu0 0
    %577 = vmatpush1.bf16.msra.mxu0 0
    %578 = vmatprep.subr.bf16.mxu0 0
    %579 = vmatpush1.bf16.msra.mxu0 0
    %580 = vmatprep.subr.bf16.mxu0 0
    %581 = vmatpush1.bf16.msra.mxu0 0
    %582 = vmatprep.subr.bf16.mxu0 0
    %583 = vmatpush1.bf16.msra.mxu0 0
    %584 = vmatprep.subr.bf16.mxu0 0
    %585 = vmatpush1.bf16.msra.mxu0 0
    %586 = vmatprep.subr.bf16.mxu0 0
    %587 = vmatpush1.bf16.msra.mxu0 0
    %588 = vmatprep.subr.bf16.mxu0 0
    %589 = vmatpush1.bf16.msra.mxu0 0
    %590 = vmatprep.subr.bf16.mxu0 0
    %591 = vmatpush1.bf16.msra.mxu0 0
    %592 = vmatprep.subr.bf16.mxu0 0
    %593 = vmatpush1.bf16.msra.mxu0 0
    %594 = vmatprep.subr.bf16.mxu0 0
    %595 = vmatpush1.bf16.msra.mxu0 0
    %596 = vmatprep.subr.bf16.mxu0 0
    %597 = vmatpush1.bf16.msra.mxu0 0
    %598 = vmatprep.mubr.bf16.mxu0 0
    %599 = vmatmul.mubr.bf16.gmra.mrb[0].mxu0 %v416
    %v600 = vpop.f32.mrb[0].mxu0
    %v601 = vadd.f32 %v336, %v600
    %v602 = vpop.f32.mrb[0].mxu0
    %v603 = vadd.f32 %v338, %v602
    %v604 = vpop.f32.mrb[0].mxu0
    %v605 = vpop.f32.mrb[0].mxu0
    %606 = vdwg.mxu0
    %v608 = vlaneseq
    %v609 = vshrl.u32 %v608, 7
    %v610 = vsub.s32 0, %v609
    %v611 = vrot.slane %v105, %v610
    %v612 = vlaneseq
    %v613 = vshrl.u32 %v612, 7
    %v614 = vsub.s32 1, %v613
    %v615 = vrot.slane %v105, %v614
    %v616 = vlaneseq
    %v617 = vshrl.u32 %v616, 7
    %v618 = vsub.s32 2, %v617
    %v619 = vrot.slane %v105, %v618
    %v620 = vlaneseq
    %v621 = vshrl.u32 %v620, 7
    %v622 = vsub.s32 3, %v621
    %v623 = vrot.slane %v105, %v622
    %v624 = vlaneseq
    %v625 = vshrl.u32 %v624, 7
    %v626 = vsub.s32 4, %v625
    %v627 = vrot.slane %v105, %v626
    %v628 = vlaneseq
    %v629 = vshrl.u32 %v628, 7
    %v630 = vsub.s32 5, %v629
    %v631 = vrot.slane %v105, %v630
    %v632 = vlaneseq
    %v633 = vshrl.u32 %v632, 7
    %v634 = vsub.s32 6, %v633
    %v635 = vrot.slane %v105, %v634
    %v636 = vlaneseq
    %v637 = vshrl.u32 %v636, 7
    %v638 = vsub.s32 7, %v637
    %v639 = vrot.slane %v105, %v638
    %v648 = vadd.f32 %v478, %v611
    %v649 = vadd.f32 %v480, %v615
    %v650 = vadd.f32 %v519, %v619
    %v651 = vadd.f32 %v521, %v623
    %v652 = vadd.f32 %v560, %v627
    %v653 = vadd.f32 %v562, %v631
    %v654 = vadd.f32 %v601, %v635
    %v655 = vadd.f32 %v603, %v639
    %v656 = vmax.f32 %v648, 0.0
    %v657 = vmax.f32 %v649, 0.0
    %v658 = vmax.f32 %v650, 0.0
    %v659 = vmax.f32 %v651, 0.0
    %v660 = vmax.f32 %v652, 0.0
    %v661 = vmax.f32 %v653, 0.0
    %v662 = vmax.f32 %v654, 0.0
    %v663 = vmax.f32 %v655, 0.0
    %v664 = vpack.c.bf16 %v656, %v656
    %v665 = vpack.c.bf16 %v657, %v657
    %v666 = vpack.c.bf16 %v658, %v658
    %v667 = vpack.c.bf16 %v659, %v659
    %v668 = vpack.c.bf16 %v660, %v660
    %v669 = vpack.c.bf16 %v661, %v661
    %v670 = vpack.c.bf16 %v662, %v662
    %v671 = vpack.c.bf16 %v663, %v663
    %v672 = vld [vmem:[#allocation4] sm:$0xff]
    %v673 = vld [vmem:[#allocation4 + $0x8] sm:$0xf]
    %v674 = vld [vmem:[#allocation4 + $0xc] sm:$0xff]
    %v675 = vld [vmem:[#allocation4 + $0x14] sm:$0xf]
    %v676 = vld [vmem:[#allocation4 + $0x18] sm:$0xff]
    %v677 = vld [vmem:[#allocation4 + $0x20] sm:$0xf]
    %v678 = vld [vmem:[#allocation4 + $0x24] sm:$0xff]
    %v679 = vld [vmem:[#allocation4 + $0x2c] sm:$0xf]
    %v680 = vld [vmem:[#allocation4 + $0x30] sm:$0xff]
    %v681 = vld [vmem:[#allocation4 + $0x38] sm:$0xf]
    %v682 = vld [vmem:[#allocation4 + $0x3c] sm:$0xff]
    %v683 = vld [vmem:[#allocation4 + $0x44] sm:$0xf]
    %v684 = vld [vmem:[#allocation4 + $0x48] sm:$0xff]
    %v685 = vld [vmem:[#allocation4 + $0x50] sm:$0xf]
    %v686 = vld [vmem:[#allocation4 + $0x54] sm:$0xff]
    %v687 = vld [vmem:[#allocation4 + $0x5c] sm:$0xf]
    %v688 = vld [vmem:[#allocation4 + $0x60] sm:$0xff]
    %v689 = vld [vmem:[#allocation4 + $0x68] sm:$0xf]
    %v690 = vld [vmem:[#allocation4 + $0x6c] sm:$0xff]
    %v691 = vld [vmem:[#allocation4 + $0x74] sm:$0xf]
    %v692 = vld [vmem:[#allocation4 + $0x78] sm:$0xff]
    %v693 = vld [vmem:[#allocation4 + $0x80] sm:$0xf]
    %v694 = vld [vmem:[#allocation4 + $0x84] sm:$0xff]
    %v695 = vld [vmem:[#allocation4 + $0x8c] sm:$0xf]
    %v696 = vld [vmem:[#allocation4 + $0x90] sm:$0xff]
    %v697 = vld [vmem:[#allocation4 + $0x98] sm:$0xf]
    %v698 = vld [vmem:[#allocation4 + $0x9c] sm:$0xff]
    %v699 = vld [vmem:[#allocation4 + $0xa4] sm:$0xf]
    %v700 = vld [vmem:[#allocation4 + $0xa8] sm:$0xff]
    %v701 = vld [vmem:[#allocation4 + $0xb0] sm:$0xf]
    %v702 = vld [vmem:[#allocation4 + $0xb4] sm:$0xff]
    %v703 = vld [vmem:[#allocation4 + $0xbc] sm:$0xf]
    %v704 = vld [vmem:[#allocation4 + $0xc0] sm:$0xff]
    %v705 = vld [vmem:[#allocation4 + $0xc8] sm:$0xf]
    %v706 = vld [vmem:[#allocation4 + $0xcc] sm:$0xff]
    %v707 = vld [vmem:[#allocation4 + $0xd4] sm:$0xf]
    %v708 = vld [vmem:[#allocation4 + $0xd8] sm:$0xff]
    %v709 = vld [vmem:[#allocation4 + $0xe0] sm:$0xf]
    %v710 = vld [vmem:[#allocation4 + $0xe4] sm:$0xff]
    %v711 = vld [vmem:[#allocation4 + $0xec] sm:$0xf]
    %v712 = vld [vmem:[#allocation4 + $0xf0] sm:$0xff]
    %v713 = vld [vmem:[#allocation4 + $0xf8] sm:$0xf]
    %v714 = vld [vmem:[#allocation4 + $0xfc] sm:$0xff]
    %v715 = vld [vmem:[#allocation4 + $0x104] sm:$0xf]
    %v716 = vld [vmem:[#allocation4 + $0x108] sm:$0xff]
    %v717 = vld [vmem:[#allocation4 + $0x110] sm:$0xf]
    %v718 = vld [vmem:[#allocation4 + $0x114] sm:$0xff]
    %v719 = vld [vmem:[#allocation4 + $0x11c] sm:$0xf]
    %v720 = vld [vmem:[#allocation4 + $0x120] sm:$0xff]
    %v721 = vld [vmem:[#allocation4 + $0x128] sm:$0xf]
    %v722 = vld [vmem:[#allocation4 + $0x12c] sm:$0xff]
    %v723 = vld [vmem:[#allocation4 + $0x134] sm:$0xf]
    %v724 = vld [vmem:[#allocation4 + $0x138] sm:$0xff]
    %v725 = vld [vmem:[#allocation4 + $0x140] sm:$0xf]
    %v726 = vld [vmem:[#allocation4 + $0x144] sm:$0xff]
    %v727 = vld [vmem:[#allocation4 + $0x14c] sm:$0xf]
    %v728 = vld [vmem:[#allocation4 + $0x150] sm:$0xff]
    %v729 = vld [vmem:[#allocation4 + $0x158] sm:$0xf]
    %v730 = vld [vmem:[#allocation4 + $0x15c] sm:$0xff]
    %v731 = vld [vmem:[#allocation4 + $0x164] sm:$0xf]
    %v732 = vld [vmem:[#allocation4 + $0x168] sm:$0xff]
    %v733 = vld [vmem:[#allocation4 + $0x170] sm:$0xf]
    %v734 = vld [vmem:[#allocation4 + $0x174] sm:$0xff]
    %v735 = vld [vmem:[#allocation4 + $0x17c] sm:$0xf]
    %v736 = vld [vmem:[#allocation4 + $0x180] sm:$0xff]
    %v737 = vld [vmem:[#allocation4 + $0x188] sm:$0xf]
    %v738 = vld [vmem:[#allocation4 + $0x18c] sm:$0xff]
    %v739 = vld [vmem:[#allocation4 + $0x194] sm:$0xf]
    %v740 = vld [vmem:[#allocation4 + $0x198] sm:$0xff]
    %v741 = vld [vmem:[#allocation4 + $0x1a0] sm:$0xf]
    %v742 = vld [vmem:[#allocation4 + $0x1a4] sm:$0xff]
    %v743 = vld [vmem:[#allocation4 + $0x1ac] sm:$0xf]
    %v744 = vld [vmem:[#allocation4 + $0x1b0] sm:$0xff]
    %v745 = vld [vmem:[#allocation4 + $0x1b8] sm:$0xf]
    %v746 = vld [vmem:[#allocation4 + $0x1bc] sm:$0xff]
    %v747 = vld [vmem:[#allocation4 + $0x1c4] sm:$0xf]
    %v748 = vld [vmem:[#allocation4 + $0x1c8] sm:$0xff]
    %v749 = vld [vmem:[#allocation4 + $0x1d0] sm:$0xf]
    %v750 = vld [vmem:[#allocation4 + $0x1d4] sm:$0xff]
    %v751 = vld [vmem:[#allocation4 + $0x1dc] sm:$0xf]
    %v752 = vld [vmem:[#allocation4 + $0x1e0] sm:$0xff]
    %v753 = vld [vmem:[#allocation4 + $0x1e8] sm:$0xf]
    %v754 = vld [vmem:[#allocation4 + $0x1ec] sm:$0xff]
    %v755 = vld [vmem:[#allocation4 + $0x1f4] sm:$0xf]
    %v756 = vld [vmem:[#allocation4 + $0x1f8] sm:$0xff]
    %v757 = vld [vmem:[#allocation4 + $0x200] sm:$0xf]
    %v758 = vld [vmem:[#allocation4 + $0x204] sm:$0xff]
    %v759 = vld [vmem:[#allocation4 + $0x20c] sm:$0xf]
    %v760 = vld [vmem:[#allocation4 + $0x210] sm:$0xff]
    %v761 = vld [vmem:[#allocation4 + $0x218] sm:$0xf]
    %v762 = vld [vmem:[#allocation4 + $0x21c] sm:$0xff]
    %v763 = vld [vmem:[#allocation4 + $0x224] sm:$0xf]
    %v764 = vld [vmem:[#allocation4 + $0x228] sm:$0xff]
    %v765 = vld [vmem:[#allocation4 + $0x230] sm:$0xf]
    %v766 = vld [vmem:[#allocation4 + $0x234] sm:$0xff]
    %v767 = vld [vmem:[#allocation4 + $0x23c] sm:$0xf]
    %v768 = vld [vmem:[#allocation4 + $0x240] sm:$0xff]
    %v769 = vld [vmem:[#allocation4 + $0x248] sm:$0xf]
    %v770 = vld [vmem:[#allocation4 + $0x24c] sm:$0xff]
    %v771 = vld [vmem:[#allocation4 + $0x254] sm:$0xf]
    %v772 = vld [vmem:[#allocation4 + $0x258] sm:$0xff]
    %v773 = vld [vmem:[#allocation4 + $0x260] sm:$0xf]
    %v774 = vld [vmem:[#allocation4 + $0x264] sm:$0xff]
    %v775 = vld [vmem:[#allocation4 + $0x26c] sm:$0xf]
    %v776 = vld [vmem:[#allocation4 + $0x270] sm:$0xff]
    %v777 = vld [vmem:[#allocation4 + $0x278] sm:$0xf]
    %v778 = vld [vmem:[#allocation4 + $0x27c] sm:$0xff]
    %v779 = vld [vmem:[#allocation4 + $0x284] sm:$0xf]
    %v780 = vld [vmem:[#allocation4 + $0x288] sm:$0xff]
    %v781 = vld [vmem:[#allocation4 + $0x290] sm:$0xf]
    %v782 = vld [vmem:[#allocation4 + $0x294] sm:$0xff]
    %v783 = vld [vmem:[#allocation4 + $0x29c] sm:$0xf]
    %v784 = vld [vmem:[#allocation4 + $0x2a0] sm:$0xff]
    %v785 = vld [vmem:[#allocation4 + $0x2a8] sm:$0xf]
    %v786 = vld [vmem:[#allocation4 + $0x2ac] sm:$0xff]
    %v787 = vld [vmem:[#allocation4 + $0x2b4] sm:$0xf]
    %v788 = vld [vmem:[#allocation4 + $0x2b8] sm:$0xff]
    %v789 = vld [vmem:[#allocation4 + $0x2c0] sm:$0xf]
    %v790 = vld [vmem:[#allocation4 + $0x2c4] sm:$0xff]
    %v791 = vld [vmem:[#allocation4 + $0x2cc] sm:$0xf]
    %v792 = vld [vmem:[#allocation4 + $0x2d0] sm:$0xff]
    %v793 = vld [vmem:[#allocation4 + $0x2d8] sm:$0xf]
    %v794 = vld [vmem:[#allocation4 + $0x2dc] sm:$0xff]
    %v795 = vld [vmem:[#allocation4 + $0x2e4] sm:$0xf]
    %v796 = vld [vmem:[#allocation4 + $0x2e8] sm:$0xff]
    %v797 = vld [vmem:[#allocation4 + $0x2f0] sm:$0xf]
    %v798 = vld [vmem:[#allocation4 + $0x2f4] sm:$0xff]
    %v799 = vld [vmem:[#allocation4 + $0x2fc] sm:$0xf]
    %v801 = vlaneseq
    %v802 = vshrl.u32 %v801, 7
    %v803 = vsub.s32 0, %v802
    %v804 = vrot.slane %v106, %v803
    %v805 = vlaneseq
    %v806 = vshrl.u32 %v805, 7
    %v807 = vsub.s32 1, %v806
    %v808 = vrot.slane %v106, %v807
    %v809 = vlaneseq
    %v810 = vshrl.u32 %v809, 7
    %v811 = vsub.s32 2, %v810
    %v812 = vrot.slane %v106, %v811
    %v944 = vunpack.c.l.b16 %v672
    %v945 = vunpack.c.h.b16 %v672
    %v946 = vunpack.c.l.b16 %v673
    %v947 = vunpack.c.l.b16 %v674
    %v948 = vunpack.c.h.b16 %v674
    %v949 = vunpack.c.l.b16 %v675
    %v950 = vunpack.c.l.b16 %v676
    %v951 = vunpack.c.h.b16 %v676
    %v952 = vunpack.c.l.b16 %v677
    %v953 = vunpack.c.l.b16 %v678
    %v954 = vunpack.c.h.b16 %v678
    %v955 = vunpack.c.l.b16 %v679
    %v956 = vunpack.c.l.b16 %v680
    %v957 = vunpack.c.h.b16 %v680
    %v958 = vunpack.c.l.b16 %v681
    %v959 = vunpack.c.l.b16 %v682
    %v960 = vunpack.c.h.b16 %v682
    %v961 = vunpack.c.l.b16 %v683
    %v962 = vunpack.c.l.b16 %v684
    %v963 = vunpack.c.h.b16 %v684
    %v964 = vunpack.c.l.b16 %v685
    %v965 = vunpack.c.l.b16 %v686
    %v966 = vunpack.c.h.b16 %v686
    %v967 = vunpack.c.l.b16 %v687
    %v968 = vunpack.c.l.b16 %v688
    %v969 = vunpack.c.h.b16 %v688
    %v970 = vunpack.c.l.b16 %v689
    %v971 = vunpack.c.l.b16 %v690
    %v972 = vunpack.c.h.b16 %v690
    %v973 = vunpack.c.l.b16 %v691
    %v974 = vunpack.c.l.b16 %v692
    %v975 = vunpack.c.h.b16 %v692
    %v976 = vunpack.c.l.b16 %v693
    %v977 = vunpack.c.l.b16 %v694
    %v978 = vunpack.c.h.b16 %v694
    %v979 = vunpack.c.l.b16 %v695
    %v980 = vunpack.c.l.b16 %v696
    %v981 = vunpack.c.h.b16 %v696
    %v982 = vunpack.c.l.b16 %v697
    %v983 = vunpack.c.l.b16 %v698
    %v984 = vunpack.c.h.b16 %v698
    %v985 = vunpack.c.l.b16 %v699
    %v986 = vunpack.c.l.b16 %v700
    %v987 = vunpack.c.h.b16 %v700
    %v988 = vunpack.c.l.b16 %v701
    %v989 = vunpack.c.l.b16 %v702
    %v990 = vunpack.c.h.b16 %v702
    %v991 = vunpack.c.l.b16 %v703
    %v992 = vunpack.c.l.b16 %v704
    %v993 = vunpack.c.h.b16 %v704
    %v994 = vunpack.c.l.b16 %v705
    %v995 = vunpack.c.l.b16 %v706
    %v996 = vunpack.c.h.b16 %v706
    %v997 = vunpack.c.l.b16 %v707
    %v998 = vunpack.c.l.b16 %v708
    %v999 = vunpack.c.h.b16 %v708
    %v1000 = vunpack.c.l.b16 %v709
    %v1001 = vunpack.c.l.b16 %v710
    %v1002 = vunpack.c.h.b16 %v710
    %v1003 = vunpack.c.l.b16 %v711
    %v1004 = vunpack.c.l.b16 %v712
    %v1005 = vunpack.c.h.b16 %v712
    %v1006 = vunpack.c.l.b16 %v713
    %v1007 = vunpack.c.l.b16 %v714
    %v1008 = vunpack.c.h.b16 %v714
    %v1009 = vunpack.c.l.b16 %v715
    %v1010 = vunpack.c.l.b16 %v716
    %v1011 = vunpack.c.h.b16 %v716
    %v1012 = vunpack.c.l.b16 %v717
    %v1013 = vunpack.c.l.b16 %v718
    %v1014 = vunpack.c.h.b16 %v718
    %v1015 = vunpack.c.l.b16 %v719
    %v1016 = vunpack.c.l.b16 %v720
    %v1017 = vunpack.c.h.b16 %v720
    %v1018 = vunpack.c.l.b16 %v721
    %v1019 = vunpack.c.l.b16 %v722
    %v1020 = vunpack.c.h.b16 %v722
    %v1021 = vunpack.c.l.b16 %v723
    %v1022 = vunpack.c.l.b16 %v724
    %v1023 = vunpack.c.h.b16 %v724
    %v1024 = vunpack.c.l.b16 %v725
    %v1025 = vunpack.c.l.b16 %v726
    %v1026 = vunpack.c.h.b16 %v726
    %v1027 = vunpack.c.l.b16 %v727
    %v1028 = vunpack.c.l.b16 %v728
    %v1029 = vunpack.c.h.b16 %v728
    %v1030 = vunpack.c.l.b16 %v729
    %v1031 = vunpack.c.l.b16 %v730
    %v1032 = vunpack.c.h.b16 %v730
    %v1033 = vunpack.c.l.b16 %v731
    %v1034 = vunpack.c.l.b16 %v732
    %v1035 = vunpack.c.h.b16 %v732
    %v1036 = vunpack.c.l.b16 %v733
    %v1037 = vunpack.c.l.b16 %v734
    %v1038 = vunpack.c.h.b16 %v734
    %v1039 = vunpack.c.l.b16 %v735
    %v1040 = vunpack.c.l.b16 %v736
    %v1041 = vunpack.c.h.b16 %v736
    %v1042 = vunpack.c.l.b16 %v737
    %v1043 = vunpack.c.l.b16 %v738
    %v1044 = vunpack.c.h.b16 %v738
    %v1045 = vunpack.c.l.b16 %v739
    %v1046 = vunpack.c.l.b16 %v740
    %v1047 = vunpack.c.h.b16 %v740
    %v1048 = vunpack.c.l.b16 %v741
    %v1049 = vunpack.c.l.b16 %v742
    %v1050 = vunpack.c.h.b16 %v742
    %v1051 = vunpack.c.l.b16 %v743
    %v1052 = vunpack.c.l.b16 %v744
    %v1053 = vunpack.c.h.b16 %v744
    %v1054 = vunpack.c.l.b16 %v745
    %v1055 = vunpack.c.l.b16 %v746
    %v1056 = vunpack.c.h.b16 %v746
    %v1057 = vunpack.c.l.b16 %v747
    %v1058 = vunpack.c.l.b16 %v748
    %v1059 = vunpack.c.h.b16 %v748
    %v1060 = vunpack.c.l.b16 %v749
    %v1061 = vunpack.c.l.b16 %v750
    %v1062 = vunpack.c.h.b16 %v750
    %v1063 = vunpack.c.l.b16 %v751
    %v1064 = vunpack.c.l.b16 %v752
    %v1065 = vunpack.c.h.b16 %v752
    %v1066 = vunpack.c.l.b16 %v753
    %v1067 = vunpack.c.l.b16 %v754
    %v1068 = vunpack.c.h.b16 %v754
    %v1069 = vunpack.c.l.b16 %v755
    %v1070 = vunpack.c.l.b16 %v756
    %v1071 = vunpack.c.h.b16 %v756
    %v1072 = vunpack.c.l.b16 %v757
    %v1073 = vunpack.c.l.b16 %v758
    %v1074 = vunpack.c.h.b16 %v758
    %v1075 = vunpack.c.l.b16 %v759
    %v1076 = vunpack.c.l.b16 %v760
    %v1077 = vunpack.c.h.b16 %v760
    %v1078 = vunpack.c.l.b16 %v761
    %v1079 = vunpack.c.l.b16 %v762
    %v1080 = vunpack.c.h.b16 %v762
    %v1081 = vunpack.c.l.b16 %v763
    %v1082 = vunpack.c.l.b16 %v764
    %v1083 = vunpack.c.h.b16 %v764
    %v1084 = vunpack.c.l.b16 %v765
    %v1085 = vunpack.c.l.b16 %v766
    %v1086 = vunpack.c.h.b16 %v766
    %v1087 = vunpack.c.l.b16 %v767
    %v1088 = vunpack.c.l.b16 %v768
    %v1089 = vunpack.c.h.b16 %v768
    %v1090 = vunpack.c.l.b16 %v769
    %v1091 = vunpack.c.l.b16 %v770
    %v1092 = vunpack.c.h.b16 %v770
    %v1093 = vunpack.c.l.b16 %v771
    %v1094 = vunpack.c.l.b16 %v772
    %v1095 = vunpack.c.h.b16 %v772
    %v1096 = vunpack.c.l.b16 %v773
    %v1097 = vunpack.c.l.b16 %v774
    %v1098 = vunpack.c.h.b16 %v774
    %v1099 = vunpack.c.l.b16 %v775
    %v1100 = vunpack.c.l.b16 %v776
    %v1101 = vunpack.c.h.b16 %v776
    %v1102 = vunpack.c.l.b16 %v777
    %v1103 = vunpack.c.l.b16 %v778
    %v1104 = vunpack.c.h.b16 %v778
    %v1105 = vunpack.c.l.b16 %v779
    %v1106 = vunpack.c.l.b16 %v780
    %v1107 = vunpack.c.h.b16 %v780
    %v1108 = vunpack.c.l.b16 %v781
    %v1109 = vunpack.c.l.b16 %v782
    %v1110 = vunpack.c.h.b16 %v782
    %v1111 = vunpack.c.l.b16 %v783
    %v1112 = vunpack.c.l.b16 %v784
    %v1113 = vunpack.c.h.b16 %v784
    %v1114 = vunpack.c.l.b16 %v785
    %v1115 = vunpack.c.l.b16 %v786
    %v1116 = vunpack.c.h.b16 %v786
    %v1117 = vunpack.c.l.b16 %v787
    %v1118 = vunpack.c.l.b16 %v788
    %v1119 = vunpack.c.h.b16 %v788
    %v1120 = vunpack.c.l.b16 %v789
    %v1121 = vunpack.c.l.b16 %v790
    %v1122 = vunpack.c.h.b16 %v790
    %v1123 = vunpack.c.l.b16 %v791
    %v1124 = vunpack.c.l.b16 %v792
    %v1125 = vunpack.c.h.b16 %v792
    %v1126 = vunpack.c.l.b16 %v793
    %v1127 = vunpack.c.l.b16 %v794
    %v1128 = vunpack.c.h.b16 %v794
    %v1129 = vunpack.c.l.b16 %v795
    %v1130 = vunpack.c.l.b16 %v796
    %v1131 = vunpack.c.h.b16 %v796
    %v1132 = vunpack.c.l.b16 %v797
    %v1133 = vunpack.c.l.b16 %v798
    %v1134 = vunpack.c.h.b16 %v798
    %v1135 = vunpack.c.l.b16 %v799
    %v1136 = vpack.c.b16 %v947, %v944
    %v1137 = vpack.c.b16 %v948, %v945
    %v1138 = vpack.c.b16 %v949, %v946
    %v1139 = vpack.c.b16 %v953, %v950
    %v1140 = vpack.c.b16 %v954, %v951
    %v1141 = vpack.c.b16 %v955, %v952
    %v1142 = vpack.c.b16 %v959, %v956
    %v1143 = vpack.c.b16 %v960, %v957
    %v1144 = vpack.c.b16 %v961, %v958
    %v1145 = vpack.c.b16 %v965, %v962
    %v1146 = vpack.c.b16 %v966, %v963
    %v1147 = vpack.c.b16 %v967, %v964
    %v1148 = vpack.c.b16 %v971, %v968
    %v1149 = vpack.c.b16 %v972, %v969
    %v1150 = vpack.c.b16 %v973, %v970
    %v1151 = vpack.c.b16 %v977, %v974
    %v1152 = vpack.c.b16 %v978, %v975
    %v1153 = vpack.c.b16 %v979, %v976
    %v1154 = vpack.c.b16 %v983, %v980
    %v1155 = vpack.c.b16 %v984, %v981
    %v1156 = vpack.c.b16 %v985, %v982
    %v1157 = vpack.c.b16 %v989, %v986
    %v1158 = vpack.c.b16 %v990, %v987
    %v1159 = vpack.c.b16 %v991, %v988
    %v1160 = vpack.c.b16 %v995, %v992
    %v1161 = vpack.c.b16 %v996, %v993
    %v1162 = vpack.c.b16 %v997, %v994
    %v1163 = vpack.c.b16 %v1001, %v998
    %v1164 = vpack.c.b16 %v1002, %v999
    %v1165 = vpack.c.b16 %v1003, %v1000
    %v1166 = vpack.c.b16 %v1007, %v1004
    %v1167 = vpack.c.b16 %v1008, %v1005
    %v1168 = vpack.c.b16 %v1009, %v1006
    %v1169 = vpack.c.b16 %v1013, %v1010
    %v1170 = vpack.c.b16 %v1014, %v1011
    %v1171 = vpack.c.b16 %v1015, %v1012
    %v1172 = vpack.c.b16 %v1019, %v1016
    %v1173 = vpack.c.b16 %v1020, %v1017
    %v1174 = vpack.c.b16 %v1021, %v1018
    %v1175 = vpack.c.b16 %v1025, %v1022
    %v1176 = vpack.c.b16 %v1026, %v1023
    %v1177 = vpack.c.b16 %v1027, %v1024
    %v1178 = vpack.c.b16 %v1031, %v1028
    %v1179 = vpack.c.b16 %v1032, %v1029
    %v1180 = vpack.c.b16 %v1033, %v1030
    %v1181 = vpack.c.b16 %v1037, %v1034
    %v1182 = vpack.c.b16 %v1038, %v1035
    %v1183 = vpack.c.b16 %v1039, %v1036
    %v1184 = vpack.c.b16 %v1043, %v1040
    %v1185 = vpack.c.b16 %v1044, %v1041
    %v1186 = vpack.c.b16 %v1045, %v1042
    %v1187 = vpack.c.b16 %v1049, %v1046
    %v1188 = vpack.c.b16 %v1050, %v1047
    %v1189 = vpack.c.b16 %v1051, %v1048
    %v1190 = vpack.c.b16 %v1055, %v1052
    %v1191 = vpack.c.b16 %v1056, %v1053
    %v1192 = vpack.c.b16 %v1057, %v1054
    %v1193 = vpack.c.b16 %v1061, %v1058
    %v1194 = vpack.c.b16 %v1062, %v1059
    %v1195 = vpack.c.b16 %v1063, %v1060
    %v1196 = vpack.c.b16 %v1067, %v1064
    %v1197 = vpack.c.b16 %v1068, %v1065
    %v1198 = vpack.c.b16 %v1069, %v1066
    %v1199 = vpack.c.b16 %v1073, %v1070
    %v1200 = vpack.c.b16 %v1074, %v1071
    %v1201 = vpack.c.b16 %v1075, %v1072
    %v1202 = vpack.c.b16 %v1079, %v1076
    %v1203 = vpack.c.b16 %v1080, %v1077
    %v1204 = vpack.c.b16 %v1081, %v1078
    %v1205 = vpack.c.b16 %v1085, %v1082
    %v1206 = vpack.c.b16 %v1086, %v1083
    %v1207 = vpack.c.b16 %v1087, %v1084
    %v1208 = vpack.c.b16 %v1091, %v1088
    %v1209 = vpack.c.b16 %v1092, %v1089
    %v1210 = vpack.c.b16 %v1093, %v1090
    %v1211 = vpack.c.b16 %v1097, %v1094
    %v1212 = vpack.c.b16 %v1098, %v1095
    %v1213 = vpack.c.b16 %v1099, %v1096
    %v1214 = vpack.c.b16 %v1103, %v1100
    %v1215 = vpack.c.b16 %v1104, %v1101
    %v1216 = vpack.c.b16 %v1105, %v1102
    %v1217 = vpack.c.b16 %v1109, %v1106
    %v1218 = vpack.c.b16 %v1110, %v1107
    %v1219 = vpack.c.b16 %v1111, %v1108
    %v1220 = vpack.c.b16 %v1115, %v1112
    %v1221 = vpack.c.b16 %v1116, %v1113
    %v1222 = vpack.c.b16 %v1117, %v1114
    %v1223 = vpack.c.b16 %v1121, %v1118
    %v1224 = vpack.c.b16 %v1122, %v1119
    %v1225 = vpack.c.b16 %v1123, %v1120
    %v1226 = vpack.c.b16 %v1127, %v1124
    %v1227 = vpack.c.b16 %v1128, %v1125
    %v1228 = vpack.c.b16 %v1129, %v1126
    %v1229 = vpack.c.b16 %v1133, %v1130
    %v1230 = vpack.c.b16 %v1134, %v1131
    %v1231 = vpack.c.b16 %v1135, %v1132
    %1328 = vmatprep.subr.bf16.mxu0 %v1137
    %1329 = vmatpush1.bf16.msra.mxu0 %v1136
    %1330 = vmatprep.subr.bf16.mxu0 %v1140
    %1331 = vmatpush1.bf16.msra.mxu0 %v1139
    %1332 = vmatprep.subr.bf16.mxu0 %v1143
    %1333 = vmatpush1.bf16.msra.mxu0 %v1142
    %1334 = vmatprep.subr.bf16.mxu0 %v1146
    %1335 = vmatpush1.bf16.msra.mxu0 %v1145
    %1336 = vmatprep.subr.bf16.mxu0 %v1149
    %1337 = vmatpush1.bf16.msra.mxu0 %v1148
    %1338 = vmatprep.subr.bf16.mxu0 %v1152
    %1339 = vmatpush1.bf16.msra.mxu0 %v1151
    %1340 = vmatprep.subr.bf16.mxu0 %v1155
    %1341 = vmatpush1.bf16.msra.mxu0 %v1154
    %1342 = vmatprep.subr.bf16.mxu0 %v1158
    %1343 = vmatpush1.bf16.msra.mxu0 %v1157
    %1344 = vmatprep.subr.bf16.mxu0 %v1161
    %1345 = vmatpush1.bf16.msra.mxu0 %v1160
    %1346 = vmatprep.subr.bf16.mxu0 %v1164
    %1347 = vmatpush1.bf16.msra.mxu0 %v1163
    %1348 = vmatprep.subr.bf16.mxu0 %v1167
    %1349 = vmatpush1.bf16.msra.mxu0 %v1166
    %1350 = vmatprep.subr.bf16.mxu0 %v1170
    %1351 = vmatpush1.bf16.msra.mxu0 %v1169
    %1352 = vmatprep.subr.bf16.mxu0 %v1173
    %1353 = vmatpush1.bf16.msra.mxu0 %v1172
    %1354 = vmatprep.subr.bf16.mxu0 %v1176
    %1355 = vmatpush1.bf16.msra.mxu0 %v1175
    %1356 = vmatprep.subr.bf16.mxu0 %v1179
    %1357 = vmatpush1.bf16.msra.mxu0 %v1178
    %1358 = vmatprep.subr.bf16.mxu0 %v1182
    %1359 = vmatpush1.bf16.msra.mxu0 %v1181
    %1360 = vmatprep.mubr.bf16.mxu0 %v665
    %1361 = vmatmul.mubr.bf16.gmra.mrb[0].mxu0 %v664
    %v1362 = vpop.f32.mrb[0].mxu0
    %v1363 = vadd.f32 %v804, %v1362
    %v1364 = vpop.f32.mrb[0].mxu0
    %v1365 = vadd.f32 %v808, %v1364
    %v1366 = vpop.f32.mrb[0].mxu0
    %v1367 = vpop.f32.mrb[0].mxu0
    %1368 = vdwg.mxu0
    %1369 = vmatprep.subr.bf16.mxu0 %v1185
    %1370 = vmatpush1.bf16.msra.mxu0 %v1184
    %1371 = vmatprep.subr.bf16.mxu0 %v1188
    %1372 = vmatpush1.bf16.msra.mxu0 %v1187
    %1373 = vmatprep.subr.bf16.mxu0 %v1191
    %1374 = vmatpush1.bf16.msra.mxu0 %v1190
    %1375 = vmatprep.subr.bf16.mxu0 %v1194
    %1376 = vmatpush1.bf16.msra.mxu0 %v1193
    %1377 = vmatprep.subr.bf16.mxu0 %v1197
    %1378 = vmatpush1.bf16.msra.mxu0 %v1196
    %1379 = vmatprep.subr.bf16.mxu0 %v1200
    %1380 = vmatpush1.bf16.msra.mxu0 %v1199
    %1381 = vmatprep.subr.bf16.mxu0 %v1203
    %1382 = vmatpush1.bf16.msra.mxu0 %v1202
    %1383 = vmatprep.subr.bf16.mxu0 %v1206
    %1384 = vmatpush1.bf16.msra.mxu0 %v1205
    %1385 = vmatprep.subr.bf16.mxu0 %v1209
    %1386 = vmatpush1.bf16.msra.mxu0 %v1208
    %1387 = vmatprep.subr.bf16.mxu0 %v1212
    %1388 = vmatpush1.bf16.msra.mxu0 %v1211
    %1389 = vmatprep.subr.bf16.mxu0 %v1215
    %1390 = vmatpush1.bf16.msra.mxu0 %v1214
    %1391 = vmatprep.subr.bf16.mxu0 %v1218
    %1392 = vmatpush1.bf16.msra.mxu0 %v1217
    %1393 = vmatprep.subr.bf16.mxu0 %v1221
    %1394 = vmatpush1.bf16.msra.mxu0 %v1220
    %1395 = vmatprep.subr.bf16.mxu0 %v1224
    %1396 = vmatpush1.bf16.msra.mxu0 %v1223
    %1397 = vmatprep.subr.bf16.mxu0 %v1227
    %1398 = vmatpush1.bf16.msra.mxu0 %v1226
    %1399 = vmatprep.subr.bf16.mxu0 %v1230
    %1400 = vmatpush1.bf16.msra.mxu0 %v1229
    %1401 = vmatprep.mubr.bf16.mxu0 %v667
    %1402 = vmatmul.mubr.bf16.gmra.mrb[0].mxu0 %v666
    %v1403 = vpop.f32.mrb[0].mxu0
    %v1404 = vadd.f32 %v1363, %v1403
    %v1405 = vpop.f32.mrb[0].mxu0
    %v1406 = vadd.f32 %v1365, %v1405
    %v1407 = vpop.f32.mrb[0].mxu0
    %v1408 = vpop.f32.mrb[0].mxu0
    %1409 = vdwg.mxu0
    %1410 = vmatprep.subr.bf16.mxu0 0
    %1411 = vmatpush1.bf16.msra.mxu0 %v1138
    %1412 = vmatprep.subr.bf16.mxu0 0
    %1413 = vmatpush1.bf16.msra.mxu0 %v1141
    %1414 = vmatprep.subr.bf16.mxu0 0
    %1415 = vmatpush1.bf16.msra.mxu0 %v1144
    %1416 = vmatprep.subr.bf16.mxu0 0
    %1417 = vmatpush1.bf16.msra.mxu0 %v1147
    %1418 = vmatprep.subr.bf16.mxu0 0
    %1419 = vmatpush1.bf16.msra.mxu0 %v1150
    %1420 = vmatprep.subr.bf16.mxu0 0
    %1421 = vmatpush1.bf16.msra.mxu0 %v1153
    %1422 = vmatprep.subr.bf16.mxu0 0
    %1423 = vmatpush1.bf16.msra.mxu0 %v1156
    %1424 = vmatprep.subr.bf16.mxu0 0
    %1425 = vmatpush1.bf16.msra.mxu0 %v1159
    %1426 = vmatprep.subr.bf16.mxu0 0
    %1427 = vmatpush1.bf16.msra.mxu0 %v1162
    %1428 = vmatprep.subr.bf16.mxu0 0
    %1429 = vmatpush1.bf16.msra.mxu0 %v1165
    %1430 = vmatprep.subr.bf16.mxu0 0
    %1431 = vmatpush1.bf16.msra.mxu0 %v1168
    %1432 = vmatprep.subr.bf16.mxu0 0
    %1433 = vmatpush1.bf16.msra.mxu0 %v1171
    %1434 = vmatprep.subr.bf16.mxu0 0
    %1435 = vmatpush1.bf16.msra.mxu0 %v1174
    %1436 = vmatprep.subr.bf16.mxu0 0
    %1437 = vmatpush1.bf16.msra.mxu0 %v1177
    %1438 = vmatprep.subr.bf16.mxu0 0
    %1439 = vmatpush1.bf16.msra.mxu0 %v1180
    %1440 = vmatprep.subr.bf16.mxu0 0
    %1441 = vmatpush1.bf16.msra.mxu0 %v1183
    %1442 = vmatprep.mubr.bf16.mxu0 %v665
    %1443 = vmatmul.mubr.bf16.gmra.mrb[0].mxu0 %v664
    %v1444 = vpop.f32.mrb[0].mxu0
    %v1445 = vadd.f32 %v812, %v1444
    %v1446 = vpop.f32.mrb[0].mxu0
    %v1447 = vpop.f32.mrb[0].mxu0
    %v1448 = vpop.f32.mrb[0].mxu0
    %1449 = vdwg.mxu0
    %1450 = vmatprep.subr.bf16.mxu0 0
    %1451 = vmatpush1.bf16.msra.mxu0 %v1186
    %1452 = vmatprep.subr.bf16.mxu0 0
    %1453 = vmatpush1.bf16.msra.mxu0 %v1189
    %1454 = vmatprep.subr.bf16.mxu0 0
    %1455 = vmatpush1.bf16.msra.mxu0 %v1192
    %1456 = vmatprep.subr.bf16.mxu0 0
    %1457 = vmatpush1.bf16.msra.mxu0 %v1195
    %1458 = vmatprep.subr.bf16.mxu0 0
    %1459 = vmatpush1.bf16.msra.mxu0 %v1198
    %1460 = vmatprep.subr.bf16.mxu0 0
    %1461 = vmatpush1.bf16.msra.mxu0 %v1201
    %1462 = vmatprep.subr.bf16.mxu0 0
    %1463 = vmatpush1.bf16.msra.mxu0 %v1204
    %1464 = vmatprep.subr.bf16.mxu0 0
    %1465 = vmatpush1.bf16.msra.mxu0 %v1207
    %1466 = vmatprep.subr.bf16.mxu0 0
    %1467 = vmatpush1.bf16.msra.mxu0 %v1210
    %1468 = vmatprep.subr.bf16.mxu0 0
    %1469 = vmatpush1.bf16.msra.mxu0 %v1213
    %1470 = vmatprep.subr.bf16.mxu0 0
    %1471 = vmatpush1.bf16.msra.mxu0 %v1216
    %1472 = vmatprep.subr.bf16.mxu0 0
    %1473 = vmatpush1.bf16.msra.mxu0 %v1219
    %1474 = vmatprep.subr.bf16.mxu0 0
    %1475 = vmatpush1.bf16.msra.mxu0 %v1222
    %1476 = vmatprep.subr.bf16.mxu0 0
    %1477 = vmatpush1.bf16.msra.mxu0 %v1225
    %1478 = vmatprep.subr.bf16.mxu0 0
    %1479 = vmatpush1.bf16.msra.mxu0 %v1228
    %1480 = vmatprep.subr.bf16.mxu0 0
    %1481 = vmatpush1.bf16.msra.mxu0 %v1231
    %1482 = vmatprep.mubr.bf16.mxu0 %v667
    %1483 = vmatmul.mubr.bf16.gmra.mrb[0].mxu0 %v666
    %v1484 = vpop.f32.mrb[0].mxu0
    %v1485 = vadd.f32 %v1445, %v1484
    %v1486 = vpop.f32.mrb[0].mxu0
    %v1487 = vpop.f32.mrb[0].mxu0
    %v1488 = vpop.f32.mrb[0].mxu0
    %1489 = vdwg.mxu0
    %v1490 = vmax.f32 %v1404, 0.0
    %v1491 = vmax.f32 %v1406, 0.0
    %v1492 = vmax.f32 %v1485, 0.0
    %v1493 = vpack.c.bf16 %v1490, %v1490
    %v1494 = vpack.c.bf16 %v1491, %v1491
    %v1495 = vpack.c.bf16 %v1492, %v1492
    %v1496 = vld [vmem:[#allocation6] sm:$0xff]
    %v1497 = vld [vmem:[#allocation6 + $0x8] sm:$0xf]
    %v1498 = vld [vmem:[#allocation6 + $0xc] sm:$0xff]
    %v1499 = vld [vmem:[#allocation6 + $0x14] sm:$0xf]
    %v1500 = vld [vmem:[#allocation6 + $0x18] sm:$0xff]
    %v1501 = vld [vmem:[#allocation6 + $0x20] sm:$0xf]
    %v1502 = vld [vmem:[#allocation6 + $0x24] sm:$0xff]
    %v1503 = vld [vmem:[#allocation6 + $0x2c] sm:$0xf]
    %v1504 = vld [vmem:[#allocation6 + $0x30] sm:$0xff]
    %v1505 = vld [vmem:[#allocation6 + $0x38] sm:$0xf]
    %v1506 = vld [vmem:[#allocation6 + $0x3c] sm:$0xff]
    %v1507 = vld [vmem:[#allocation6 + $0x44] sm:$0xf]
    %v1508 = vld [vmem:[#allocation6 + $0x48] sm:$0xff]
    %v1509 = vld [vmem:[#allocation6 + $0x50] sm:$0xf]
    %v1510 = vld [vmem:[#allocation6 + $0x54] sm:$0xff]
    %v1511 = vld [vmem:[#allocation6 + $0x5c] sm:$0xf]
    %v1512 = vld [vmem:[#allocation6 + $0x60] sm:$0xff]
    %v1513 = vld [vmem:[#allocation6 + $0x68] sm:$0xf]
    %v1514 = vld [vmem:[#allocation6 + $0x6c] sm:$0xff]
    %v1515 = vld [vmem:[#allocation6 + $0x74] sm:$0xf]
    %v1516 = vld [vmem:[#allocation6 + $0x78] sm:$0xff]
    %v1517 = vld [vmem:[#allocation6 + $0x80] sm:$0xf]
    %v1518 = vld [vmem:[#allocation6 + $0x84] sm:$0xff]
    %v1519 = vld [vmem:[#allocation6 + $0x8c] sm:$0xf]
    %v1520 = vld [vmem:[#allocation6 + $0x90] sm:$0xff]
    %v1521 = vld [vmem:[#allocation6 + $0x98] sm:$0xf]
    %v1522 = vld [vmem:[#allocation6 + $0x9c] sm:$0xff]
    %v1523 = vld [vmem:[#allocation6 + $0xa4] sm:$0xf]
    %v1524 = vld [vmem:[#allocation6 + $0xa8] sm:$0xff]
    %v1525 = vld [vmem:[#allocation6 + $0xb0] sm:$0xf]
    %v1526 = vld [vmem:[#allocation6 + $0xb4] sm:$0xff]
    %v1527 = vld [vmem:[#allocation6 + $0xbc] sm:$0xf]
    %v1528 = vld [vmem:[#allocation6 + $0xc0] sm:$0xff]
    %v1529 = vld [vmem:[#allocation6 + $0xc8] sm:$0xf]
    %v1530 = vld [vmem:[#allocation6 + $0xcc] sm:$0xff]
    %v1531 = vld [vmem:[#allocation6 + $0xd4] sm:$0xf]
    %v1532 = vld [vmem:[#allocation6 + $0xd8] sm:$0xff]
    %v1533 = vld [vmem:[#allocation6 + $0xe0] sm:$0xf]
    %v1534 = vld [vmem:[#allocation6 + $0xe4] sm:$0xff]
    %v1535 = vld [vmem:[#allocation6 + $0xec] sm:$0xf]
    %v1536 = vld [vmem:[#allocation6 + $0xf0] sm:$0xff]
    %v1537 = vld [vmem:[#allocation6 + $0xf8] sm:$0xf]
    %v1538 = vld [vmem:[#allocation6 + $0xfc] sm:$0xff]
    %v1539 = vld [vmem:[#allocation6 + $0x104] sm:$0xf]
    %v1540 = vld [vmem:[#allocation6 + $0x108] sm:$0xff]
    %v1541 = vld [vmem:[#allocation6 + $0x110] sm:$0xf]
    %v1542 = vld [vmem:[#allocation6 + $0x114] sm:$0xff]
    %v1543 = vld [vmem:[#allocation6 + $0x11c] sm:$0xf]
    %v1544 = vld [vmem:[#allocation6 + $0x120] sm:$0xff]
    %v1545 = vld [vmem:[#allocation6 + $0x128] sm:$0xf]
    %v1546 = vld [vmem:[#allocation6 + $0x12c] sm:$0xff]
    %v1547 = vld [vmem:[#allocation6 + $0x134] sm:$0xf]
    %v1548 = vld [vmem:[#allocation6 + $0x138] sm:$0xff]
    %v1549 = vld [vmem:[#allocation6 + $0x140] sm:$0xf]
    %v1550 = vld [vmem:[#allocation6 + $0x144] sm:$0xff]
    %v1551 = vld [vmem:[#allocation6 + $0x14c] sm:$0xf]
    %v1552 = vld [vmem:[#allocation6 + $0x150] sm:$0xff]
    %v1553 = vld [vmem:[#allocation6 + $0x158] sm:$0xf]
    %v1554 = vld [vmem:[#allocation6 + $0x15c] sm:$0xff]
    %v1555 = vld [vmem:[#allocation6 + $0x164] sm:$0xf]
    %v1556 = vld [vmem:[#allocation6 + $0x168] sm:$0xff]
    %v1557 = vld [vmem:[#allocation6 + $0x170] sm:$0xf]
    %v1558 = vld [vmem:[#allocation6 + $0x174] sm:$0xff]
    %v1559 = vld [vmem:[#allocation6 + $0x17c] sm:$0xf]
    %v1560 = vld [vmem:[#allocation6 + $0x180] sm:$0xff]
    %v1561 = vld [vmem:[#allocation6 + $0x188] sm:$0xf]
    %v1562 = vld [vmem:[#allocation6 + $0x18c] sm:$0xff]
    %v1563 = vld [vmem:[#allocation6 + $0x194] sm:$0xf]
    %v1564 = vld [vmem:[#allocation6 + $0x198] sm:$0xff]
    %v1565 = vld [vmem:[#allocation6 + $0x1a0] sm:$0xf]
    %v1566 = vld [vmem:[#allocation6 + $0x1a4] sm:$0xff]
    %v1567 = vld [vmem:[#allocation6 + $0x1ac] sm:$0xf]
    %v1568 = vld [vmem:[#allocation6 + $0x1b0] sm:$0xff]
    %v1569 = vld [vmem:[#allocation6 + $0x1b8] sm:$0xf]
    %v1570 = vld [vmem:[#allocation6 + $0x1bc] sm:$0xff]
    %v1571 = vld [vmem:[#allocation6 + $0x1c4] sm:$0xf]
    %v1572 = vld [vmem:[#allocation6 + $0x1c8] sm:$0xff]
    %v1573 = vld [vmem:[#allocation6 + $0x1d0] sm:$0xf]
    %v1574 = vld [vmem:[#allocation6 + $0x1d4] sm:$0xff]
    %v1575 = vld [vmem:[#allocation6 + $0x1dc] sm:$0xf]
    %v1576 = vld [vmem:[#allocation6 + $0x1e0] sm:$0xff]
    %v1577 = vld [vmem:[#allocation6 + $0x1e8] sm:$0xf]
    %v1578 = vld [vmem:[#allocation6 + $0x1ec] sm:$0xff]
    %v1579 = vld [vmem:[#allocation6 + $0x1f4] sm:$0xf]
    %v1580 = vld [vmem:[#allocation6 + $0x1f8] sm:$0xff]
    %v1581 = vld [vmem:[#allocation6 + $0x200] sm:$0xf]
    %v1582 = vld [vmem:[#allocation6 + $0x204] sm:$0xff]
    %v1583 = vld [vmem:[#allocation6 + $0x20c] sm:$0xf]
    %v1584 = vld [vmem:[#allocation6 + $0x210] sm:$0xff]
    %v1585 = vld [vmem:[#allocation6 + $0x218] sm:$0xf]
    %v1586 = vld [vmem:[#allocation6 + $0x21c] sm:$0xff]
    %v1587 = vld [vmem:[#allocation6 + $0x224] sm:$0xf]
    %v1588 = vld [vmem:[#allocation6 + $0x228] sm:$0xff]
    %v1589 = vld [vmem:[#allocation6 + $0x230] sm:$0xf]
    %v1590 = vld [vmem:[#allocation6 + $0x234] sm:$0xff]
    %v1591 = vld [vmem:[#allocation6 + $0x23c] sm:$0xf]
    %v1592 = vld [vmem:[#allocation6 + $0x240] sm:$0xff]
    %v1593 = vld [vmem:[#allocation6 + $0x248] sm:$0xf]
    %v1594 = vld [vmem:[#allocation6 + $0x24c] sm:$0xff]
    %v1595 = vld [vmem:[#allocation6 + $0x254] sm:$0xf]
    %v1596 = vld [vmem:[#allocation6 + $0x258] sm:$0xff]
    %v1597 = vld [vmem:[#allocation6 + $0x260] sm:$0xf]
    %v1598 = vld [vmem:[#allocation6 + $0x264] sm:$0xff]
    %v1599 = vld [vmem:[#allocation6 + $0x26c] sm:$0xf]
    %v1600 = vld [vmem:[#allocation6 + $0x270] sm:$0xff]
    %v1601 = vld [vmem:[#allocation6 + $0x278] sm:$0xf]
    %v1602 = vld [vmem:[#allocation6 + $0x27c] sm:$0xff]
    %v1603 = vld [vmem:[#allocation6 + $0x284] sm:$0xf]
    %v1604 = vld [vmem:[#allocation6 + $0x288] sm:$0xff]
    %v1605 = vld [vmem:[#allocation6 + $0x290] sm:$0xf]
    %v1606 = vld [vmem:[#allocation6 + $0x294] sm:$0xff]
    %v1607 = vld [vmem:[#allocation6 + $0x29c] sm:$0xf]
    %v1608 = vld [vmem:[#allocation6 + $0x2a0] sm:$0xff]
    %v1609 = vld [vmem:[#allocation6 + $0x2a8] sm:$0xf]
    %v1610 = vld [vmem:[#allocation6 + $0x2ac] sm:$0xff]
    %v1611 = vld [vmem:[#allocation6 + $0x2b4] sm:$0xf]
    %v1612 = vld [vmem:[#allocation6 + $0x2b8] sm:$0xff]
    %v1613 = vld [vmem:[#allocation6 + $0x2c0] sm:$0xf]
    %v1614 = vld [vmem:[#allocation6 + $0x2c4] sm:$0xff]
    %v1615 = vld [vmem:[#allocation6 + $0x2cc] sm:$0xf]
    %v1616 = vld [vmem:[#allocation6 + $0x2d0] sm:$0xff]
    %v1617 = vld [vmem:[#allocation6 + $0x2d8] sm:$0xf]
    %v1618 = vld [vmem:[#allocation6 + $0x2dc] sm:$0xff]
    %v1619 = vld [vmem:[#allocation6 + $0x2e4] sm:$0xf]
    %v1620 = vld [vmem:[#allocation6 + $0x2e8] sm:$0xff]
    %v1621 = vld [vmem:[#allocation6 + $0x2f0] sm:$0xf]
    %v1622 = vld [vmem:[#allocation6 + $0x2f4] sm:$0xff]
    %v1623 = vld [vmem:[#allocation6 + $0x2fc] sm:$0xf]
    %v1625 = vlaneseq
    %v1626 = vshrl.u32 %v1625, 7
    %v1627 = vsub.s32 0, %v1626
    %v1628 = vrot.slane %v107, %v1627
    %v1629 = vlaneseq
    %v1630 = vshrl.u32 %v1629, 7
    %v1631 = vsub.s32 1, %v1630
    %v1632 = vrot.slane %v107, %v1631
    %v1633 = vlaneseq
    %v1634 = vshrl.u32 %v1633, 7
    %v1635 = vsub.s32 2, %v1634
    %v1636 = vrot.slane %v107, %v1635
    %v1768 = vunpack.c.l.b16 %v1496
    %v1769 = vunpack.c.h.b16 %v1496
    %v1770 = vunpack.c.l.b16 %v1497
    %v1771 = vunpack.c.l.b16 %v1498
    %v1772 = vunpack.c.h.b16 %v1498
    %v1773 = vunpack.c.l.b16 %v1499
    %v1774 = vunpack.c.l.b16 %v1500
    %v1775 = vunpack.c.h.b16 %v1500
    %v1776 = vunpack.c.l.b16 %v1501
    %v1777 = vunpack.c.l.b16 %v1502
    %v1778 = vunpack.c.h.b16 %v1502
    %v1779 = vunpack.c.l.b16 %v1503
    %v1780 = vunpack.c.l.b16 %v1504
    %v1781 = vunpack.c.h.b16 %v1504
    %v1782 = vunpack.c.l.b16 %v1505
    %v1783 = vunpack.c.l.b16 %v1506
    %v1784 = vunpack.c.h.b16 %v1506
    %v1785 = vunpack.c.l.b16 %v1507
    %v1786 = vunpack.c.l.b16 %v1508
    %v1787 = vunpack.c.h.b16 %v1508
    %v1788 = vunpack.c.l.b16 %v1509
    %v1789 = vunpack.c.l.b16 %v1510
    %v1790 = vunpack.c.h.b16 %v1510
    %v1791 = vunpack.c.l.b16 %v1511
    %v1792 = vunpack.c.l.b16 %v1512
    %v1793 = vunpack.c.h.b16 %v1512
    %v1794 = vunpack.c.l.b16 %v1513
    %v1795 = vunpack.c.l.b16 %v1514
    %v1796 = vunpack.c.h.b16 %v1514
    %v1797 = vunpack.c.l.b16 %v1515
    %v1798 = vunpack.c.l.b16 %v1516
    %v1799 = vunpack.c.h.b16 %v1516
    %v1800 = vunpack.c.l.b16 %v1517
    %v1801 = vunpack.c.l.b16 %v1518
    %v1802 = vunpack.c.h.b16 %v1518
    %v1803 = vunpack.c.l.b16 %v1519
    %v1804 = vunpack.c.l.b16 %v1520
    %v1805 = vunpack.c.h.b16 %v1520
    %v1806 = vunpack.c.l.b16 %v1521
    %v1807 = vunpack.c.l.b16 %v1522
    %v1808 = vunpack.c.h.b16 %v1522
    %v1809 = vunpack.c.l.b16 %v1523
    %v1810 = vunpack.c.l.b16 %v1524
    %v1811 = vunpack.c.h.b16 %v1524
    %v1812 = vunpack.c.l.b16 %v1525
    %v1813 = vunpack.c.l.b16 %v1526
    %v1814 = vunpack.c.h.b16 %v1526
    %v1815 = vunpack.c.l.b16 %v1527
    %v1816 = vunpack.c.l.b16 %v1528
    %v1817 = vunpack.c.h.b16 %v1528
    %v1818 = vunpack.c.l.b16 %v1529
    %v1819 = vunpack.c.l.b16 %v1530
    %v1820 = vunpack.c.h.b16 %v1530
    %v1821 = vunpack.c.l.b16 %v1531
    %v1822 = vunpack.c.l.b16 %v1532
    %v1823 = vunpack.c.h.b16 %v1532
    %v1824 = vunpack.c.l.b16 %v1533
    %v1825 = vunpack.c.l.b16 %v1534
    %v1826 = vunpack.c.h.b16 %v1534
    %v1827 = vunpack.c.l.b16 %v1535
    %v1828 = vunpack.c.l.b16 %v1536
    %v1829 = vunpack.c.h.b16 %v1536
    %v1830 = vunpack.c.l.b16 %v1537
    %v1831 = vunpack.c.l.b16 %v1538
    %v1832 = vunpack.c.h.b16 %v1538
    %v1833 = vunpack.c.l.b16 %v1539
    %v1834 = vunpack.c.l.b16 %v1540
    %v1835 = vunpack.c.h.b16 %v1540
    %v1836 = vunpack.c.l.b16 %v1541
    %v1837 = vunpack.c.l.b16 %v1542
    %v1838 = vunpack.c.h.b16 %v1542
    %v1839 = vunpack.c.l.b16 %v1543
    %v1840 = vunpack.c.l.b16 %v1544
    %v1841 = vunpack.c.h.b16 %v1544
    %v1842 = vunpack.c.l.b16 %v1545
    %v1843 = vunpack.c.l.b16 %v1546
    %v1844 = vunpack.c.h.b16 %v1546
    %v1845 = vunpack.c.l.b16 %v1547
    %v1846 = vunpack.c.l.b16 %v1548
    %v1847 = vunpack.c.h.b16 %v1548
    %v1848 = vunpack.c.l.b16 %v1549
    %v1849 = vunpack.c.l.b16 %v1550
    %v1850 = vunpack.c.h.b16 %v1550
    %v1851 = vunpack.c.l.b16 %v1551
    %v1852 = vunpack.c.l.b16 %v1552
    %v1853 = vunpack.c.h.b16 %v1552
    %v1854 = vunpack.c.l.b16 %v1553
    %v1855 = vunpack.c.l.b16 %v1554
    %v1856 = vunpack.c.h.b16 %v1554
    %v1857 = vunpack.c.l.b16 %v1555
    %v1858 = vunpack.c.l.b16 %v1556
    %v1859 = vunpack.c.h.b16 %v1556
    %v1860 = vunpack.c.l.b16 %v1557
    %v1861 = vunpack.c.l.b16 %v1558
    %v1862 = vunpack.c.h.b16 %v1558
    %v1863 = vunpack.c.l.b16 %v1559
    %v1864 = vunpack.c.l.b16 %v1560
    %v1865 = vunpack.c.h.b16 %v1560
    %v1866 = vunpack.c.l.b16 %v1561
    %v1867 = vunpack.c.l.b16 %v1562
    %v1868 = vunpack.c.h.b16 %v1562
    %v1869 = vunpack.c.l.b16 %v1563
    %v1870 = vunpack.c.l.b16 %v1564
    %v1871 = vunpack.c.h.b16 %v1564
    %v1872 = vunpack.c.l.b16 %v1565
    %v1873 = vunpack.c.l.b16 %v1566
    %v1874 = vunpack.c.h.b16 %v1566
    %v1875 = vunpack.c.l.b16 %v1567
    %v1876 = vunpack.c.l.b16 %v1568
    %v1877 = vunpack.c.h.b16 %v1568
    %v1878 = vunpack.c.l.b16 %v1569
    %v1879 = vunpack.c.l.b16 %v1570
    %v1880 = vunpack.c.h.b16 %v1570
    %v1881 = vunpack.c.l.b16 %v1571
    %v1882 = vunpack.c.l.b16 %v1572
    %v1883 = vunpack.c.h.b16 %v1572
    %v1884 = vunpack.c.l.b16 %v1573
    %v1885 = vunpack.c.l.b16 %v1574
    %v1886 = vunpack.c.h.b16 %v1574
    %v1887 = vunpack.c.l.b16 %v1575
    %v1888 = vunpack.c.l.b16 %v1576
    %v1889 = vunpack.c.h.b16 %v1576
    %v1890 = vunpack.c.l.b16 %v1577
    %v1891 = vunpack.c.l.b16 %v1578
    %v1892 = vunpack.c.h.b16 %v1578
    %v1893 = vunpack.c.l.b16 %v1579
    %v1894 = vunpack.c.l.b16 %v1580
    %v1895 = vunpack.c.h.b16 %v1580
    %v1896 = vunpack.c.l.b16 %v1581
    %v1897 = vunpack.c.l.b16 %v1582
    %v1898 = vunpack.c.h.b16 %v1582
    %v1899 = vunpack.c.l.b16 %v1583
    %v1900 = vunpack.c.l.b16 %v1584
    %v1901 = vunpack.c.h.b16 %v1584
    %v1902 = vunpack.c.l.b16 %v1585
    %v1903 = vunpack.c.l.b16 %v1586
    %v1904 = vunpack.c.h.b16 %v1586
    %v1905 = vunpack.c.l.b16 %v1587
    %v1906 = vunpack.c.l.b16 %v1588
    %v1907 = vunpack.c.h.b16 %v1588
    %v1908 = vunpack.c.l.b16 %v1589
    %v1909 = vunpack.c.l.b16 %v1590
    %v1910 = vunpack.c.h.b16 %v1590
    %v1911 = vunpack.c.l.b16 %v1591
    %v1912 = vunpack.c.l.b16 %v1592
    %v1913 = vunpack.c.h.b16 %v1592
    %v1914 = vunpack.c.l.b16 %v1593
    %v1915 = vunpack.c.l.b16 %v1594
    %v1916 = vunpack.c.h.b16 %v1594
    %v1917 = vunpack.c.l.b16 %v1595
    %v1918 = vunpack.c.l.b16 %v1596
    %v1919 = vunpack.c.h.b16 %v1596
    %v1920 = vunpack.c.l.b16 %v1597
    %v1921 = vunpack.c.l.b16 %v1598
    %v1922 = vunpack.c.h.b16 %v1598
    %v1923 = vunpack.c.l.b16 %v1599
    %v1924 = vunpack.c.l.b16 %v1600
    %v1925 = vunpack.c.h.b16 %v1600
    %v1926 = vunpack.c.l.b16 %v1601
    %v1927 = vunpack.c.l.b16 %v1602
    %v1928 = vunpack.c.h.b16 %v1602
    %v1929 = vunpack.c.l.b16 %v1603
    %v1930 = vunpack.c.l.b16 %v1604
    %v1931 = vunpack.c.h.b16 %v1604
    %v1932 = vunpack.c.l.b16 %v1605
    %v1933 = vunpack.c.l.b16 %v1606
    %v1934 = vunpack.c.h.b16 %v1606
    %v1935 = vunpack.c.l.b16 %v1607
    %v1936 = vunpack.c.l.b16 %v1608
    %v1937 = vunpack.c.h.b16 %v1608
    %v1938 = vunpack.c.l.b16 %v1609
    %v1939 = vunpack.c.l.b16 %v1610
    %v1940 = vunpack.c.h.b16 %v1610
    %v1941 = vunpack.c.l.b16 %v1611
    %v1942 = vunpack.c.l.b16 %v1612
    %v1943 = vunpack.c.h.b16 %v1612
    %v1944 = vunpack.c.l.b16 %v1613
    %v1945 = vunpack.c.l.b16 %v1614
    %v1946 = vunpack.c.h.b16 %v1614
    %v1947 = vunpack.c.l.b16 %v1615
    %v1948 = vunpack.c.l.b16 %v1616
    %v1949 = vunpack.c.h.b16 %v1616
    %v1950 = vunpack.c.l.b16 %v1617
    %v1951 = vunpack.c.l.b16 %v1618
    %v1952 = vunpack.c.h.b16 %v1618
    %v1953 = vunpack.c.l.b16 %v1619
    %v1954 = vunpack.c.l.b16 %v1620
    %v1955 = vunpack.c.h.b16 %v1620
    %v1956 = vunpack.c.l.b16 %v1621
    %v1957 = vunpack.c.l.b16 %v1622
    %v1958 = vunpack.c.h.b16 %v1622
    %v1959 = vunpack.c.l.b16 %v1623
    %v1960 = vpack.c.b16 %v1771, %v1768
    %v1961 = vpack.c.b16 %v1772, %v1769
    %v1962 = vpack.c.b16 %v1773, %v1770
    %v1963 = vpack.c.b16 %v1777, %v1774
    %v1964 = vpack.c.b16 %v1778, %v1775
    %v1965 = vpack.c.b16 %v1779, %v1776
    %v1966 = vpack.c.b16 %v1783, %v1780
    %v1967 = vpack.c.b16 %v1784, %v1781
    %v1968 = vpack.c.b16 %v1785, %v1782
    %v1969 = vpack.c.b16 %v1789, %v1786
    %v1970 = vpack.c.b16 %v1790, %v1787
    %v1971 = vpack.c.b16 %v1791, %v1788
    %v1972 = vpack.c.b16 %v1795, %v1792
    %v1973 = vpack.c.b16 %v1796, %v1793
    %v1974 = vpack.c.b16 %v1797, %v1794
    %v1975 = vpack.c.b16 %v1801, %v1798
    %v1976 = vpack.c.b16 %v1802, %v1799
    %v1977 = vpack.c.b16 %v1803, %v1800
    %v1978 = vpack.c.b16 %v1807, %v1804
    %v1979 = vpack.c.b16 %v1808, %v1805
    %v1980 = vpack.c.b16 %v1809, %v1806
    %v1981 = vpack.c.b16 %v1813, %v1810
    %v1982 = vpack.c.b16 %v1814, %v1811
    %v1983 = vpack.c.b16 %v1815, %v1812
    %v1984 = vpack.c.b16 %v1819, %v1816
    %v1985 = vpack.c.b16 %v1820, %v1817
    %v1986 = vpack.c.b16 %v1821, %v1818
    %v1987 = vpack.c.b16 %v1825, %v1822
    %v1988 = vpack.c.b16 %v1826, %v1823
    %v1989 = vpack.c.b16 %v1827, %v1824
    %v1990 = vpack.c.b16 %v1831, %v1828
    %v1991 = vpack.c.b16 %v1832, %v1829
    %v1992 = vpack.c.b16 %v1833, %v1830
    %v1993 = vpack.c.b16 %v1837, %v1834
    %v1994 = vpack.c.b16 %v1838, %v1835
    %v1995 = vpack.c.b16 %v1839, %v1836
    %v1996 = vpack.c.b16 %v1843, %v1840
    %v1997 = vpack.c.b16 %v1844, %v1841
    %v1998 = vpack.c.b16 %v1845, %v1842
    %v1999 = vpack.c.b16 %v1849, %v1846
    %v2000 = vpack.c.b16 %v1850, %v1847
    %v2001 = vpack.c.b16 %v1851, %v1848
    %v2002 = vpack.c.b16 %v1855, %v1852
    %v2003 = vpack.c.b16 %v1856, %v1853
    %v2004 = vpack.c.b16 %v1857, %v1854
    %v2005 = vpack.c.b16 %v1861, %v1858
    %v2006 = vpack.c.b16 %v1862, %v1859
    %v2007 = vpack.c.b16 %v1863, %v1860
    %v2008 = vpack.c.b16 %v1867, %v1864
    %v2009 = vpack.c.b16 %v1868, %v1865
    %v2010 = vpack.c.b16 %v1869, %v1866
    %v2011 = vpack.c.b16 %v1873, %v1870
    %v2012 = vpack.c.b16 %v1874, %v1871
    %v2013 = vpack.c.b16 %v1875, %v1872
    %v2014 = vpack.c.b16 %v1879, %v1876
    %v2015 = vpack.c.b16 %v1880, %v1877
    %v2016 = vpack.c.b16 %v1881, %v1878
    %v2017 = vpack.c.b16 %v1885, %v1882
    %v2018 = vpack.c.b16 %v1886, %v1883
    %v2019 = vpack.c.b16 %v1887, %v1884
    %v2020 = vpack.c.b16 %v1891, %v1888
    %v2021 = vpack.c.b16 %v1892, %v1889
    %v2022 = vpack.c.b16 %v1893, %v1890
    %v2023 = vpack.c.b16 %v1897, %v1894
    %v2024 = vpack.c.b16 %v1898, %v1895
    %v2025 = vpack.c.b16 %v1899, %v1896
    %v2026 = vpack.c.b16 %v1903, %v1900
    %v2027 = vpack.c.b16 %v1904, %v1901
    %v2028 = vpack.c.b16 %v1905, %v1902
    %v2029 = vpack.c.b16 %v1909, %v1906
    %v2030 = vpack.c.b16 %v1910, %v1907
    %v2031 = vpack.c.b16 %v1911, %v1908
    %v2032 = vpack.c.b16 %v1915, %v1912
    %v2033 = vpack.c.b16 %v1916, %v1913
    %v2034 = vpack.c.b16 %v1917, %v1914
    %v2035 = vpack.c.b16 %v1921, %v1918
    %v2036 = vpack.c.b16 %v1922, %v1919
    %v2037 = vpack.c.b16 %v1923, %v1920
    %v2038 = vpack.c.b16 %v1927, %v1924
    %v2039 = vpack.c.b16 %v1928, %v1925
    %v2040 = vpack.c.b16 %v1929, %v1926
    %v2041 = vpack.c.b16 %v1933, %v1930
    %v2042 = vpack.c.b16 %v1934, %v1931
    %v2043 = vpack.c.b16 %v1935, %v1932
    %v2044 = vpack.c.b16 %v1939, %v1936
    %v2045 = vpack.c.b16 %v1940, %v1937
    %v2046 = vpack.c.b16 %v1941, %v1938
    %v2047 = vpack.c.b16 %v1945, %v1942
    %v2048 = vpack.c.b16 %v1946, %v1943
    %v2049 = vpack.c.b16 %v1947, %v1944
    %v2050 = vpack.c.b16 %v1951, %v1948
    %v2051 = vpack.c.b16 %v1952, %v1949
    %v2052 = vpack.c.b16 %v1953, %v1950
    %v2053 = vpack.c.b16 %v1957, %v1954
    %v2054 = vpack.c.b16 %v1958, %v1955
    %v2055 = vpack.c.b16 %v1959, %v1956
    %2152 = vmatprep.subr.bf16.mxu0 %v1961
    %2153 = vmatpush1.bf16.msra.mxu0 %v1960
    %2154 = vmatprep.subr.bf16.mxu0 %v1964
    %2155 = vmatpush1.bf16.msra.mxu0 %v1963
    %2156 = vmatprep.subr.bf16.mxu0 %v1967
    %2157 = vmatpush1.bf16.msra.mxu0 %v1966
    %2158 = vmatprep.subr.bf16.mxu0 %v1970
    %2159 = vmatpush1.bf16.msra.mxu0 %v1969
    %2160 = vmatprep.subr.bf16.mxu0 %v1973
    %2161 = vmatpush1.bf16.msra.mxu0 %v1972
    %2162 = vmatprep.subr.bf16.mxu0 %v1976
    %2163 = vmatpush1.bf16.msra.mxu0 %v1975
    %2164 = vmatprep.subr.bf16.mxu0 %v1979
    %2165 = vmatpush1.bf16.msra.mxu0 %v1978
    %2166 = vmatprep.subr.bf16.mxu0 %v1982
    %2167 = vmatpush1.bf16.msra.mxu0 %v1981
    %2168 = vmatprep.subr.bf16.mxu0 %v1985
    %2169 = vmatpush1.bf16.msra.mxu0 %v1984
    %2170 = vmatprep.subr.bf16.mxu0 %v1988
    %2171 = vmatpush1.bf16.msra.mxu0 %v1987
    %2172 = vmatprep.subr.bf16.mxu0 %v1991
    %2173 = vmatpush1.bf16.msra.mxu0 %v1990
    %2174 = vmatprep.subr.bf16.mxu0 %v1994
    %2175 = vmatpush1.bf16.msra.mxu0 %v1993
    %2176 = vmatprep.subr.bf16.mxu0 %v1997
    %2177 = vmatpush1.bf16.msra.mxu0 %v1996
    %2178 = vmatprep.subr.bf16.mxu0 %v2000
    %2179 = vmatpush1.bf16.msra.mxu0 %v1999
    %2180 = vmatprep.subr.bf16.mxu0 %v2003
    %2181 = vmatpush1.bf16.msra.mxu0 %v2002
    %2182 = vmatprep.subr.bf16.mxu0 %v2006
    %2183 = vmatpush1.bf16.msra.mxu0 %v2005
    %2184 = vmatprep.mubr.bf16.mxu0 %v669
    %2185 = vmatmul.mubr.bf16.gmra.mrb[0].mxu0 %v668
    %v2186 = vpop.f32.mrb[0].mxu0
    %v2187 = vadd.f32 %v1628, %v2186
    %v2188 = vpop.f32.mrb[0].mxu0
    %v2189 = vadd.f32 %v1632, %v2188
    %v2190 = vpop.f32.mrb[0].mxu0
    %v2191 = vpop.f32.mrb[0].mxu0
    %2192 = vdwg.mxu0
    %2193 = vmatprep.subr.bf16.mxu0 %v2009
    %2194 = vmatpush1.bf16.msra.mxu0 %v2008
    %2195 = vmatprep.subr.bf16.mxu0 %v2012
    %2196 = vmatpush1.bf16.msra.mxu0 %v2011
    %2197 = vmatprep.subr.bf16.mxu0 %v2015
    %2198 = vmatpush1.bf16.msra.mxu0 %v2014
    %2199 = vmatprep.subr.bf16.mxu0 %v2018
    %2200 = vmatpush1.bf16.msra.mxu0 %v2017
    %2201 = vmatprep.subr.bf16.mxu0 %v2021
    %2202 = vmatpush1.bf16.msra.mxu0 %v2020
    %2203 = vmatprep.subr.bf16.mxu0 %v2024
    %2204 = vmatpush1.bf16.msra.mxu0 %v2023
    %2205 = vmatprep.subr.bf16.mxu0 %v2027
    %2206 = vmatpush1.bf16.msra.mxu0 %v2026
    %2207 = vmatprep.subr.bf16.mxu0 %v2030
    %2208 = vmatpush1.bf16.msra.mxu0 %v2029
    %2209 = vmatprep.subr.bf16.mxu0 %v2033
    %2210 = vmatpush1.bf16.msra.mxu0 %v2032
    %2211 = vmatprep.subr.bf16.mxu0 %v2036
    %2212 = vmatpush1.bf16.msra.mxu0 %v2035
    %2213 = vmatprep.subr.bf16.mxu0 %v2039
    %2214 = vmatpush1.bf16.msra.mxu0 %v2038
    %2215 = vmatprep.subr.bf16.mxu0 %v2042
    %2216 = vmatpush1.bf16.msra.mxu0 %v2041
    %2217 = vmatprep.subr.bf16.mxu0 %v2045
    %2218 = vmatpush1.bf16.msra.mxu0 %v2044
    %2219 = vmatprep.subr.bf16.mxu0 %v2048
    %2220 = vmatpush1.bf16.msra.mxu0 %v2047
    %2221 = vmatprep.subr.bf16.mxu0 %v2051
    %2222 = vmatpush1.bf16.msra.mxu0 %v2050
    %2223 = vmatprep.subr.bf16.mxu0 %v2054
    %2224 = vmatpush1.bf16.msra.mxu0 %v2053
    %2225 = vmatprep.mubr.bf16.mxu0 %v671
    %2226 = vmatmul.mubr.bf16.gmra.mrb[0].mxu0 %v670
    %v2227 = vpop.f32.mrb[0].mxu0
    %v2228 = vadd.f32 %v2187, %v2227
    %v2229 = vpop.f32.mrb[0].mxu0
    %v2230 = vadd.f32 %v2189, %v2229
    %v2231 = vpop.f32.mrb[0].mxu0
    %v2232 = vpop.f32.mrb[0].mxu0
    %2233 = vdwg.mxu0
    %2234 = vmatprep.subr.bf16.mxu0 0
    %2235 = vmatpush1.bf16.msra.mxu0 %v1962
    %2236 = vmatprep.subr.bf16.mxu0 0
    %2237 = vmatpush1.bf16.msra.mxu0 %v1965
    %2238 = vmatprep.subr.bf16.mxu0 0
    %2239 = vmatpush1.bf16.msra.mxu0 %v1968
    %2240 = vmatprep.subr.bf16.mxu0 0
    %2241 = vmatpush1.bf16.msra.mxu0 %v1971
    %2242 = vmatprep.subr.bf16.mxu0 0
    %2243 = vmatpush1.bf16.msra.mxu0 %v1974
    %2244 = vmatprep.subr.bf16.mxu0 0
    %2245 = vmatpush1.bf16.msra.mxu0 %v1977
    %2246 = vmatprep.subr.bf16.mxu0 0
    %2247 = vmatpush1.bf16.msra.mxu0 %v1980
    %2248 = vmatprep.subr.bf16.mxu0 0
    %2249 = vmatpush1.bf16.msra.mxu0 %v1983
    %2250 = vmatprep.subr.bf16.mxu0 0
    %2251 = vmatpush1.bf16.msra.mxu0 %v1986
    %2252 = vmatprep.subr.bf16.mxu0 0
    %2253 = vmatpush1.bf16.msra.mxu0 %v1989
    %2254 = vmatprep.subr.bf16.mxu0 0
    %2255 = vmatpush1.bf16.msra.mxu0 %v1992
    %2256 = vmatprep.subr.bf16.mxu0 0
    %2257 = vmatpush1.bf16.msra.mxu0 %v1995
    %2258 = vmatprep.subr.bf16.mxu0 0
    %2259 = vmatpush1.bf16.msra.mxu0 %v1998
    %2260 = vmatprep.subr.bf16.mxu0 0
    %2261 = vmatpush1.bf16.msra.mxu0 %v2001
    %2262 = vmatprep.subr.bf16.mxu0 0
    %2263 = vmatpush1.bf16.msra.mxu0 %v2004
    %2264 = vmatprep.subr.bf16.mxu0 0
    %2265 = vmatpush1.bf16.msra.mxu0 %v2007
    %2266 = vmatprep.mubr.bf16.mxu0 %v669
    %2267 = vmatmul.mubr.bf16.gmra.mrb[0].mxu0 %v668
    %v2268 = vpop.f32.mrb[0].mxu0
    %v2269 = vadd.f32 %v1636, %v2268
    %v2270 = vpop.f32.mrb[0].mxu0
    %v2271 = vpop.f32.mrb[0].mxu0
    %v2272 = vpop.f32.mrb[0].mxu0
    %2273 = vdwg.mxu0
    %2274 = vmatprep.subr.bf16.mxu0 0
    %2275 = vmatpush1.bf16.msra.mxu0 %v2010
    %2276 = vmatprep.subr.bf16.mxu0 0
    %2277 = vmatpush1.bf16.msra.mxu0 %v2013
    %2278 = vmatprep.subr.bf16.mxu0 0
    %2279 = vmatpush1.bf16.msra.mxu0 %v2016
    %2280 = vmatprep.subr.bf16.mxu0 0
    %2281 = vmatpush1.bf16.msra.mxu0 %v2019
    %2282 = vmatprep.subr.bf16.mxu0 0
    %2283 = vmatpush1.bf16.msra.mxu0 %v2022
    %2284 = vmatprep.subr.bf16.mxu0 0
    %2285 = vmatpush1.bf16.msra.mxu0 %v2025
    %2286 = vmatprep.subr.bf16.mxu0 0
    %2287 = vmatpush1.bf16.msra.mxu0 %v2028
    %2288 = vmatprep.subr.bf16.mxu0 0
    %2289 = vmatpush1.bf16.msra.mxu0 %v2031
    %2290 = vmatprep.subr.bf16.mxu0 0
    %2291 = vmatpush1.bf16.msra.mxu0 %v2034
    %2292 = vmatprep.subr.bf16.mxu0 0
    %2293 = vmatpush1.bf16.msra.mxu0 %v2037
    %2294 = vmatprep.subr.bf16.mxu0 0
    %2295 = vmatpush1.bf16.msra.mxu0 %v2040
    %2296 = vmatprep.subr.bf16.mxu0 0
    %2297 = vmatpush1.bf16.msra.mxu0 %v2043
    %2298 = vmatprep.subr.bf16.mxu0 0
    %2299 = vmatpush1.bf16.msra.mxu0 %v2046
    %2300 = vmatprep.subr.bf16.mxu0 0
    %2301 = vmatpush1.bf16.msra.mxu0 %v2049
    %2302 = vmatprep.subr.bf16.mxu0 0
    %2303 = vmatpush1.bf16.msra.mxu0 %v2052
    %2304 = vmatprep.subr.bf16.mxu0 0
    %2305 = vmatpush1.bf16.msra.mxu0 %v2055
    %2306 = vmatprep.mubr.bf16.mxu0 %v671
    %2307 = vmatmul.mubr.bf16.gmra.mrb[0].mxu0 %v670
    %v2308 = vpop.f32.mrb[0].mxu0
    %v2309 = vadd.f32 %v2269, %v2308
    %v2310 = vpop.f32.mrb[0].mxu0
    %v2311 = vpop.f32.mrb[0].mxu0
    %v2312 = vpop.f32.mrb[0].mxu0
    %2313 = vdwg.mxu0
    %v2314 = vmax.f32 %v2228, 0.0
    %v2315 = vmax.f32 %v2230, 0.0
    %v2316 = vmax.f32 %v2309, 0.0
    %v2317 = vpack.c.bf16 %v2314, %v2314
    %v2318 = vpack.c.bf16 %v2315, %v2315
    %v2319 = vpack.c.bf16 %v2316, %v2316
    %v2320 = vld [vmem:[#allocation7] sm:$0xf]
    %v2321 = vld [vmem:[#allocation7 + $0x4] sm:$0xf]
    %v2322 = vld [vmem:[#allocation7 + $0x8] sm:$0xf]
    %v2323 = vld [vmem:[#allocation7 + $0xc] sm:$0xf]
    %v2324 = vld [vmem:[#allocation7 + $0x10] sm:$0xf]
    %v2325 = vld [vmem:[#allocation7 + $0x14] sm:$0xf]
    %v2326 = vld [vmem:[#allocation7 + $0x18] sm:$0xf]
    %v2327 = vld [vmem:[#allocation7 + $0x1c] sm:$0xf]
    %v2328 = vld [vmem:[#allocation7 + $0x20] sm:$0xf]
    %v2329 = vld [vmem:[#allocation7 + $0x24] sm:$0xf]
    %v2330 = vld [vmem:[#allocation7 + $0x28] sm:$0xf]
    %v2331 = vld [vmem:[#allocation7 + $0x2c] sm:$0xf]
    %v2332 = vld [vmem:[#allocation7 + $0x30] sm:$0xf]
    %v2333 = vld [vmem:[#allocation7 + $0x34] sm:$0xf]
    %v2334 = vld [vmem:[#allocation7 + $0x38] sm:$0xf]
    %v2335 = vld [vmem:[#allocation7 + $0x3c] sm:$0xf]
    %v2336 = vld [vmem:[#allocation7 + $0x40] sm:$0xf]
    %v2337 = vld [vmem:[#allocation7 + $0x44] sm:$0xf]
    %v2338 = vld [vmem:[#allocation7 + $0x48] sm:$0xf]
    %v2339 = vld [vmem:[#allocation7 + $0x4c] sm:$0xf]
    %v2340 = vld [vmem:[#allocation7 + $0x50] sm:$0xf]
    %v2341 = vld [vmem:[#allocation7 + $0x54] sm:$0xf]
    %v2342 = vld [vmem:[#allocation7 + $0x58] sm:$0xf]
    %v2343 = vld [vmem:[#allocation7 + $0x5c] sm:$0xf]
    %v2344 = vld [vmem:[#allocation7 + $0x60] sm:$0xf]
    %v2345 = vld [vmem:[#allocation7 + $0x64] sm:$0xf]
    %v2346 = vld [vmem:[#allocation7 + $0x68] sm:$0xf]
    %v2347 = vld [vmem:[#allocation7 + $0x6c] sm:$0xf]
    %v2348 = vld [vmem:[#allocation7 + $0x70] sm:$0xf]
    %v2349 = vld [vmem:[#allocation7 + $0x74] sm:$0xf]
    %v2350 = vld [vmem:[#allocation7 + $0x78] sm:$0xf]
    %v2351 = vld [vmem:[#allocation7 + $0x7c] sm:$0xf]
    %v2352 = vld [vmem:[#allocation7 + $0x80] sm:$0xf]
    %v2353 = vld [vmem:[#allocation7 + $0x84] sm:$0xf]
    %v2354 = vld [vmem:[#allocation7 + $0x88] sm:$0xf]
    %v2355 = vld [vmem:[#allocation7 + $0x8c] sm:$0xf]
    %v2356 = vld [vmem:[#allocation7 + $0x90] sm:$0xf]
    %v2357 = vld [vmem:[#allocation7 + $0x94] sm:$0xf]
    %v2358 = vld [vmem:[#allocation7 + $0x98] sm:$0xf]
    %v2359 = vld [vmem:[#allocation7 + $0x9c] sm:$0xf]
    %v2360 = vld [vmem:[#allocation7 + $0xa0] sm:$0xf]
    %v2361 = vld [vmem:[#allocation7 + $0xa4] sm:$0xf]
    %v2362 = vld [vmem:[#allocation7 + $0xa8] sm:$0xf]
    %v2363 = vld [vmem:[#allocation7 + $0xac] sm:$0xf]
    %v2364 = vld [vmem:[#allocation7 + $0xb0] sm:$0xf]
    %v2365 = vld [vmem:[#allocation7 + $0xb4] sm:$0xf]
    %v2366 = vld [vmem:[#allocation7 + $0xb8] sm:$0xf]
    %v2367 = vld [vmem:[#allocation7 + $0xbc] sm:$0xf]
    %v2368 = vld [vmem:[#allocation9] sm:$0xf]
    %v2369 = vld [vmem:[#allocation9 + $0x4] sm:$0xf]
    %v2370 = vld [vmem:[#allocation9 + $0x8] sm:$0xf]
    %v2371 = vld [vmem:[#allocation9 + $0xc] sm:$0xf]
    %v2372 = vld [vmem:[#allocation9 + $0x10] sm:$0xf]
    %v2373 = vld [vmem:[#allocation9 + $0x14] sm:$0xf]
    %v2374 = vld [vmem:[#allocation9 + $0x18] sm:$0xf]
    %v2375 = vld [vmem:[#allocation9 + $0x1c] sm:$0xf]
    %v2376 = vld [vmem:[#allocation9 + $0x20] sm:$0xf]
    %v2377 = vld [vmem:[#allocation9 + $0x24] sm:$0xf]
    %v2378 = vld [vmem:[#allocation9 + $0x28] sm:$0xf]
    %v2379 = vld [vmem:[#allocation9 + $0x2c] sm:$0xf]
    %v2380 = vld [vmem:[#allocation9 + $0x30] sm:$0xf]
    %v2381 = vld [vmem:[#allocation9 + $0x34] sm:$0xf]
    %v2382 = vld [vmem:[#allocation9 + $0x38] sm:$0xf]
    %v2383 = vld [vmem:[#allocation9 + $0x3c] sm:$0xf]
    %v2384 = vld [vmem:[#allocation9 + $0x40] sm:$0xf]
    %v2385 = vld [vmem:[#allocation9 + $0x44] sm:$0xf]
    %v2386 = vld [vmem:[#allocation9 + $0x48] sm:$0xf]
    %v2387 = vld [vmem:[#allocation9 + $0x4c] sm:$0xf]
    %v2388 = vld [vmem:[#allocation9 + $0x50] sm:$0xf]
    %v2389 = vld [vmem:[#allocation9 + $0x54] sm:$0xf]
    %v2390 = vld [vmem:[#allocation9 + $0x58] sm:$0xf]
    %v2391 = vld [vmem:[#allocation9 + $0x5c] sm:$0xf]
    %v2392 = vld [vmem:[#allocation9 + $0x60] sm:$0xf]
    %v2393 = vld [vmem:[#allocation9 + $0x64] sm:$0xf]
    %v2394 = vld [vmem:[#allocation9 + $0x68] sm:$0xf]
    %v2395 = vld [vmem:[#allocation9 + $0x6c] sm:$0xf]
    %v2396 = vld [vmem:[#allocation9 + $0x70] sm:$0xf]
    %v2397 = vld [vmem:[#allocation9 + $0x74] sm:$0xf]
    %v2398 = vld [vmem:[#allocation9 + $0x78] sm:$0xf]
    %v2399 = vld [vmem:[#allocation9 + $0x7c] sm:$0xf]
    %v2400 = vld [vmem:[#allocation9 + $0x80] sm:$0xf]
    %v2401 = vld [vmem:[#allocation9 + $0x84] sm:$0xf]
    %v2402 = vld [vmem:[#allocation9 + $0x88] sm:$0xf]
    %v2403 = vld [vmem:[#allocation9 + $0x8c] sm:$0xf]
    %v2404 = vld [vmem:[#allocation9 + $0x90] sm:$0xf]
    %v2405 = vld [vmem:[#allocation9 + $0x94] sm:$0xf]
    %v2406 = vld [vmem:[#allocation9 + $0x98] sm:$0xf]
    %v2407 = vld [vmem:[#allocation9 + $0x9c] sm:$0xf]
    %v2408 = vld [vmem:[#allocation9 + $0xa0] sm:$0xf]
    %v2409 = vld [vmem:[#allocation9 + $0xa4] sm:$0xf]
    %v2410 = vld [vmem:[#allocation9 + $0xa8] sm:$0xf]
    %v2411 = vld [vmem:[#allocation9 + $0xac] sm:$0xf]
    %v2412 = vld [vmem:[#allocation9 + $0xb0] sm:$0xf]
    %v2413 = vld [vmem:[#allocation9 + $0xb4] sm:$0xf]
    %v2414 = vld [vmem:[#allocation9 + $0xb8] sm:$0xf]
    %v2415 = vld [vmem:[#allocation9 + $0xbc] sm:$0xf]
    %v2464 = vunpack.c.l.b16 %v2368
    %v2465 = vunpack.c.l.b16 %v2369
    %v2466 = vunpack.c.l.b16 %v2370
    %v2467 = vunpack.c.l.b16 %v2371
    %v2468 = vunpack.c.l.b16 %v2372
    %v2469 = vunpack.c.l.b16 %v2373
    %v2470 = vunpack.c.l.b16 %v2374
    %v2471 = vunpack.c.l.b16 %v2375
    %v2472 = vunpack.c.l.b16 %v2376
    %v2473 = vunpack.c.l.b16 %v2377
    %v2474 = vunpack.c.l.b16 %v2378
    %v2475 = vunpack.c.l.b16 %v2379
    %v2476 = vunpack.c.l.b16 %v2380
    %v2477 = vunpack.c.l.b16 %v2381
    %v2478 = vunpack.c.l.b16 %v2382
    %v2479 = vunpack.c.l.b16 %v2383
    %v2480 = vunpack.c.l.b16 %v2384
    %v2481 = vunpack.c.l.b16 %v2385
    %v2482 = vunpack.c.l.b16 %v2386
    %v2483 = vunpack.c.l.b16 %v2387
    %v2484 = vunpack.c.l.b16 %v2388
    %v2485 = vunpack.c.l.b16 %v2389
    %v2486 = vunpack.c.l.b16 %v2390
    %v2487 = vunpack.c.l.b16 %v2391
    %v2488 = vunpack.c.l.b16 %v2392
    %v2489 = vunpack.c.l.b16 %v2393
    %v2490 = vunpack.c.l.b16 %v2394
    %v2491 = vunpack.c.l.b16 %v2395
    %v2492 = vunpack.c.l.b16 %v2396
    %v2493 = vunpack.c.l.b16 %v2397
    %v2494 = vunpack.c.l.b16 %v2398
    %v2495 = vunpack.c.l.b16 %v2399
    %v2496 = vunpack.c.l.b16 %v2400
    %v2497 = vunpack.c.l.b16 %v2401
    %v2498 = vunpack.c.l.b16 %v2402
    %v2499 = vunpack.c.l.b16 %v2403
    %v2500 = vunpack.c.l.b16 %v2404
    %v2501 = vunpack.c.l.b16 %v2405
    %v2502 = vunpack.c.l.b16 %v2406
    %v2503 = vunpack.c.l.b16 %v2407
    %v2504 = vunpack.c.l.b16 %v2408
    %v2505 = vunpack.c.l.b16 %v2409
    %v2506 = vunpack.c.l.b16 %v2410
    %v2507 = vunpack.c.l.b16 %v2411
    %v2508 = vunpack.c.l.b16 %v2412
    %v2509 = vunpack.c.l.b16 %v2413
    %v2510 = vunpack.c.l.b16 %v2414
    %v2511 = vunpack.c.l.b16 %v2415
    %v2512 = vpack.c.b16 %v2465, %v2464
    %v2513 = vpack.c.b16 %v2467, %v2466
    %v2514 = vpack.c.b16 %v2469, %v2468
    %v2515 = vpack.c.b16 %v2471, %v2470
    %v2516 = vpack.c.b16 %v2473, %v2472
    %v2517 = vpack.c.b16 %v2475, %v2474
    %v2518 = vpack.c.b16 %v2477, %v2476
    %v2519 = vpack.c.b16 %v2479, %v2478
    %v2520 = vpack.c.b16 %v2481, %v2480
    %v2521 = vpack.c.b16 %v2483, %v2482
    %v2522 = vpack.c.b16 %v2485, %v2484
    %v2523 = vpack.c.b16 %v2487, %v2486
    %v2524 = vpack.c.b16 %v2489, %v2488
    %v2525 = vpack.c.b16 %v2491, %v2490
    %v2526 = vpack.c.b16 %v2493, %v2492
    %v2527 = vpack.c.b16 %v2495, %v2494
    %v2528 = vpack.c.b16 %v2497, %v2496
    %v2529 = vpack.c.b16 %v2499, %v2498
    %v2530 = vpack.c.b16 %v2501, %v2500
    %v2531 = vpack.c.b16 %v2503, %v2502
    %v2532 = vpack.c.b16 %v2505, %v2504
    %v2533 = vpack.c.b16 %v2507, %v2506
    %v2534 = vpack.c.b16 %v2509, %v2508
    %v2535 = vpack.c.b16 %v2511, %v2510
    %2560 = vmatprep.subr.bf16.mxu0 0
    %2561 = vmatpush1.bf16.msra.mxu0 %v2512
    %2562 = vmatprep.subr.bf16.mxu0 0
    %2563 = vmatpush1.bf16.msra.mxu0 %v2513
    %2564 = vmatprep.subr.bf16.mxu0 0
    %2565 = vmatpush1.bf16.msra.mxu0 %v2514
    %2566 = vmatprep.subr.bf16.mxu0 0
    %2567 = vmatpush1.bf16.msra.mxu0 %v2515
    %2568 = vmatprep.subr.bf16.mxu0 0
    %2569 = vmatpush1.bf16.msra.mxu0 %v2516
    %2570 = vmatprep.subr.bf16.mxu0 0
    %2571 = vmatpush1.bf16.msra.mxu0 %v2517
    %2572 = vmatprep.subr.bf16.mxu0 0
    %2573 = vmatpush1.bf16.msra.mxu0 %v2518
    %2574 = vmatprep.subr.bf16.mxu0 0
    %2575 = vmatpush1.bf16.msra.mxu0 %v2519
    %2576 = vmatprep.subr.bf16.mxu0 0
    %2577 = vmatpush1.bf16.msra.mxu0 %v2520
    %2578 = vmatprep.subr.bf16.mxu0 0
    %2579 = vmatpush1.bf16.msra.mxu0 %v2521
    %2580 = vmatprep.subr.bf16.mxu0 0
    %2581 = vmatpush1.bf16.msra.mxu0 %v2522
    %2582 = vmatprep.subr.bf16.mxu0 0
    %2583 = vmatpush1.bf16.msra.mxu0 %v2523
    %2584 = vmatprep.subr.bf16.mxu0 0
    %2585 = vmatpush1.bf16.msra.mxu0 %v2524
    %2586 = vmatprep.subr.bf16.mxu0 0
    %2587 = vmatpush1.bf16.msra.mxu0 %v2525
    %2588 = vmatprep.subr.bf16.mxu0 0
    %2589 = vmatpush1.bf16.msra.mxu0 %v2526
    %2590 = vmatprep.subr.bf16.mxu0 0
    %2591 = vmatpush1.bf16.msra.mxu0 %v2527
    %2592 = vmatprep.mubr.bf16.mxu0 %v2318
    %2593 = vmatmul.mubr.bf16.gmra.mrb[0].mxu0 %v2317
    %v2594 = vpop.f32.mrb[0].mxu0
    %v2595 = vadd.f32 0.0, %v2594
    %v2596 = vpop.f32.mrb[0].mxu0
    %v2597 = vpop.f32.mrb[0].mxu0
    %v2598 = vpop.f32.mrb[0].mxu0
    %2599 = vdwg.mxu0
    %2600 = vmatprep.subr.bf16.mxu0 0
    %2601 = vmatpush1.bf16.msra.mxu0 %v2528
    %2602 = vmatprep.subr.bf16.mxu0 0
    %2603 = vmatpush1.bf16.msra.mxu0 %v2529
    %2604 = vmatprep.subr.bf16.mxu0 0
    %2605 = vmatpush1.bf16.msra.mxu0 %v2530
    %2606 = vmatprep.subr.bf16.mxu0 0
    %2607 = vmatpush1.bf16.msra.mxu0 %v2531
    %2608 = vmatprep.subr.bf16.mxu0 0
    %2609 = vmatpush1.bf16.msra.mxu0 %v2532
    %2610 = vmatprep.subr.bf16.mxu0 0
    %2611 = vmatpush1.bf16.msra.mxu0 %v2533
    %2612 = vmatprep.subr.bf16.mxu0 0
    %2613 = vmatpush1.bf16.msra.mxu0 %v2534
    %2614 = vmatprep.subr.bf16.mxu0 0
    %2615 = vmatpush1.bf16.msra.mxu0 %v2535
    %2616 = vmatprep.subr.bf16.mxu0 0
    %2617 = vmatpush1.bf16.msra.mxu0 0
    %2618 = vmatprep.subr.bf16.mxu0 0
    %2619 = vmatpush1.bf16.msra.mxu0 0
    %2620 = vmatprep.subr.bf16.mxu0 0
    %2621 = vmatpush1.bf16.msra.mxu0 0
    %2622 = vmatprep.subr.bf16.mxu0 0
    %2623 = vmatpush1.bf16.msra.mxu0 0
    %2624 = vmatprep.subr.bf16.mxu0 0
    %2625 = vmatpush1.bf16.msra.mxu0 0
    %2626 = vmatprep.subr.bf16.mxu0 0
    %2627 = vmatpush1.bf16.msra.mxu0 0
    %2628 = vmatprep.subr.bf16.mxu0 0
    %2629 = vmatpush1.bf16.msra.mxu0 0
    %2630 = vmatprep.subr.bf16.mxu0 0
    %2631 = vmatpush1.bf16.msra.mxu0 0
    %2632 = vmatprep.mubr.bf16.mxu0 0
    %2633 = vmatmul.mubr.bf16.gmra.mrb[0].mxu0 %v2319
    %v2634 = vpop.f32.mrb[0].mxu0
    %v2635 = vadd.f32 %v2595, %v2634
    %v2636 = vpop.f32.mrb[0].mxu0
    %v2637 = vpop.f32.mrb[0].mxu0
    %v2638 = vpop.f32.mrb[0].mxu0
    %2639 = vdwg.mxu0
    %v2688 = vunpack.c.l.b16 %v2320
    %v2689 = vunpack.c.l.b16 %v2321
    %v2690 = vunpack.c.l.b16 %v2322
    %v2691 = vunpack.c.l.b16 %v2323
    %v2692 = vunpack.c.l.b16 %v2324
    %v2693 = vunpack.c.l.b16 %v2325
    %v2694 = vunpack.c.l.b16 %v2326
    %v2695 = vunpack.c.l.b16 %v2327
    %v2696 = vunpack.c.l.b16 %v2328
    %v2697 = vunpack.c.l.b16 %v2329
    %v2698 = vunpack.c.l.b16 %v2330
    %v2699 = vunpack.c.l.b16 %v2331
    %v2700 = vunpack.c.l.b16 %v2332
    %v2701 = vunpack.c.l.b16 %v2333
    %v2702 = vunpack.c.l.b16 %v2334
    %v2703 = vunpack.c.l.b16 %v2335
    %v2704 = vunpack.c.l.b16 %v2336
    %v2705 = vunpack.c.l.b16 %v2337
    %v2706 = vunpack.c.l.b16 %v2338
    %v2707 = vunpack.c.l.b16 %v2339
    %v2708 = vunpack.c.l.b16 %v2340
    %v2709 = vunpack.c.l.b16 %v2341
    %v2710 = vunpack.c.l.b16 %v2342
    %v2711 = vunpack.c.l.b16 %v2343
    %v2712 = vunpack.c.l.b16 %v2344
    %v2713 = vunpack.c.l.b16 %v2345
    %v2714 = vunpack.c.l.b16 %v2346
    %v2715 = vunpack.c.l.b16 %v2347
    %v2716 = vunpack.c.l.b16 %v2348
    %v2717 = vunpack.c.l.b16 %v2349
    %v2718 = vunpack.c.l.b16 %v2350
    %v2719 = vunpack.c.l.b16 %v2351
    %v2720 = vunpack.c.l.b16 %v2352
    %v2721 = vunpack.c.l.b16 %v2353
    %v2722 = vunpack.c.l.b16 %v2354
    %v2723 = vunpack.c.l.b16 %v2355
    %v2724 = vunpack.c.l.b16 %v2356
    %v2725 = vunpack.c.l.b16 %v2357
    %v2726 = vunpack.c.l.b16 %v2358
    %v2727 = vunpack.c.l.b16 %v2359
    %v2728 = vunpack.c.l.b16 %v2360
    %v2729 = vunpack.c.l.b16 %v2361
    %v2730 = vunpack.c.l.b16 %v2362
    %v2731 = vunpack.c.l.b16 %v2363
    %v2732 = vunpack.c.l.b16 %v2364
    %v2733 = vunpack.c.l.b16 %v2365
    %v2734 = vunpack.c.l.b16 %v2366
    %v2735 = vunpack.c.l.b16 %v2367
    %v2736 = vpack.c.b16 %v2689, %v2688
    %v2737 = vpack.c.b16 %v2691, %v2690
    %v2738 = vpack.c.b16 %v2693, %v2692
    %v2739 = vpack.c.b16 %v2695, %v2694
    %v2740 = vpack.c.b16 %v2697, %v2696
    %v2741 = vpack.c.b16 %v2699, %v2698
    %v2742 = vpack.c.b16 %v2701, %v2700
    %v2743 = vpack.c.b16 %v2703, %v2702
    %v2744 = vpack.c.b16 %v2705, %v2704
    %v2745 = vpack.c.b16 %v2707, %v2706
    %v2746 = vpack.c.b16 %v2709, %v2708
    %v2747 = vpack.c.b16 %v2711, %v2710
    %v2748 = vpack.c.b16 %v2713, %v2712
    %v2749 = vpack.c.b16 %v2715, %v2714
    %v2750 = vpack.c.b16 %v2717, %v2716
    %v2751 = vpack.c.b16 %v2719, %v2718
    %v2752 = vpack.c.b16 %v2721, %v2720
    %v2753 = vpack.c.b16 %v2723, %v2722
    %v2754 = vpack.c.b16 %v2725, %v2724
    %v2755 = vpack.c.b16 %v2727, %v2726
    %v2756 = vpack.c.b16 %v2729, %v2728
    %v2757 = vpack.c.b16 %v2731, %v2730
    %v2758 = vpack.c.b16 %v2733, %v2732
    %v2759 = vpack.c.b16 %v2735, %v2734
    %2784 = vmatprep.subr.bf16.mxu0 0
    %2785 = vmatpush1.bf16.msra.mxu0 %v2736
    %2786 = vmatprep.subr.bf16.mxu0 0
    %2787 = vmatpush1.bf16.msra.mxu0 %v2737
    %2788 = vmatprep.subr.bf16.mxu0 0
    %2789 = vmatpush1.bf16.msra.mxu0 %v2738
    %2790 = vmatprep.subr.bf16.mxu0 0
    %2791 = vmatpush1.bf16.msra.mxu0 %v2739
    %2792 = vmatprep.subr.bf16.mxu0 0
    %2793 = vmatpush1.bf16.msra.mxu0 %v2740
    %2794 = vmatprep.subr.bf16.mxu0 0
    %2795 = vmatpush1.bf16.msra.mxu0 %v2741
    %2796 = vmatprep.subr.bf16.mxu0 0
    %2797 = vmatpush1.bf16.msra.mxu0 %v2742
    %2798 = vmatprep.subr.bf16.mxu0 0
    %2799 = vmatpush1.bf16.msra.mxu0 %v2743
    %2800 = vmatprep.subr.bf16.mxu0 0
    %2801 = vmatpush1.bf16.msra.mxu0 %v2744
    %2802 = vmatprep.subr.bf16.mxu0 0
    %2803 = vmatpush1.bf16.msra.mxu0 %v2745
    %2804 = vmatprep.subr.bf16.mxu0 0
    %2805 = vmatpush1.bf16.msra.mxu0 %v2746
    %2806 = vmatprep.subr.bf16.mxu0 0
    %2807 = vmatpush1.bf16.msra.mxu0 %v2747
    %2808 = vmatprep.subr.bf16.mxu0 0
    %2809 = vmatpush1.bf16.msra.mxu0 %v2748
    %2810 = vmatprep.subr.bf16.mxu0 0
    %2811 = vmatpush1.bf16.msra.mxu0 %v2749
    %2812 = vmatprep.subr.bf16.mxu0 0
    %2813 = vmatpush1.bf16.msra.mxu0 %v2750
    %2814 = vmatprep.subr.bf16.mxu0 0
    %2815 = vmatpush1.bf16.msra.mxu0 %v2751
    %2816 = vmatprep.mubr.bf16.mxu0 %v1494
    %2817 = vmatmul.mubr.bf16.gmra.mrb[0].mxu0 %v1493
    %v2818 = vpop.f32.mrb[0].mxu0
    %v2819 = vadd.f32 %v2635, %v2818
    %v2820 = vpop.f32.mrb[0].mxu0
    %v2821 = vpop.f32.mrb[0].mxu0
    %v2822 = vpop.f32.mrb[0].mxu0
    %2823 = vdwg.mxu0
    %2824 = vmatprep.subr.bf16.mxu0 0
    %2825 = vmatpush1.bf16.msra.mxu0 %v2752
    %2826 = vmatprep.subr.bf16.mxu0 0
    %2827 = vmatpush1.bf16.msra.mxu0 %v2753
    %2828 = vmatprep.subr.bf16.mxu0 0
    %2829 = vmatpush1.bf16.msra.mxu0 %v2754
    %2830 = vmatprep.subr.bf16.mxu0 0
    %2831 = vmatpush1.bf16.msra.mxu0 %v2755
    %2832 = vmatprep.subr.bf16.mxu0 0
    %2833 = vmatpush1.bf16.msra.mxu0 %v2756
    %2834 = vmatprep.subr.bf16.mxu0 0
    %2835 = vmatpush1.bf16.msra.mxu0 %v2757
    %2836 = vmatprep.subr.bf16.mxu0 0
    %2837 = vmatpush1.bf16.msra.mxu0 %v2758
    %2838 = vmatprep.subr.bf16.mxu0 0
    %2839 = vmatpush1.bf16.msra.mxu0 %v2759
    %2840 = vmatprep.subr.bf16.mxu0 0
    %2841 = vmatpush1.bf16.msra.mxu0 0
    %2842 = vmatprep.subr.bf16.mxu0 0
    %2843 = vmatpush1.bf16.msra.mxu0 0
    %2844 = vmatprep.subr.bf16.mxu0 0
    %2845 = vmatpush1.bf16.msra.mxu0 0
    %2846 = vmatprep.subr.bf16.mxu0 0
    %2847 = vmatpush1.bf16.msra.mxu0 0
    %2848 = vmatprep.subr.bf16.mxu0 0
    %2849 = vmatpush1.bf16.msra.mxu0 0
    %2850 = vmatprep.subr.bf16.mxu0 0
    %2851 = vmatpush1.bf16.msra.mxu0 0
    %2852 = vmatprep.subr.bf16.mxu0 0
    %2853 = vmatpush1.bf16.msra.mxu0 0
    %2854 = vmatprep.subr.bf16.mxu0 0
    %2855 = vmatpush1.bf16.msra.mxu0 0
    %2856 = vmatprep.mubr.bf16.mxu0 0
    %2857 = vmatmul.mubr.bf16.gmra.mrb[0].mxu0 %v1495
    %v2858 = vpop.f32.mrb[0].mxu0
    %v2859 = vadd.f32 %v2819, %v2858
    %v2860 = vpop.f32.mrb[0].mxu0
    %v2861 = vpop.f32.mrb[0].mxu0
    %v2862 = vpop.f32.mrb[0].mxu0
    %2863 = vdwg.mxu0
    %v2865 = vlaneseq
    %v2866 = vshrl.u32 %v2865, 7
    %v2867 = vsub.s32 0, %v2866
    %v2868 = vrot.slane %v108, %v2867
    %v2870 = vadd.f32 %v2859, %v2868
    %2871 = vst [vmem:[%s9] sm:$0xff] %v2870
    // Predicated region
    $region58: #{critic_forward.1} parent=1 // pred_check
      _
    $region59: #{critic_forward.1} parent=1 // pred_check_branch
      %2873 = sbr.rel (0) target = $region61
    $region60: #{critic_forward.1} parent=1 // pred_region
      _
    $region61: #{critic_forward.1} parent=1 // pred_fallthru
      _
    // Predicated region
    $region62: #{critic_forward.1} parent=1 // pred_check
      _
    $region63: #{critic_forward.1} parent=1 // pred_check_branch
      %2875 = sbr.rel (0) target = $region65
    $region64: #{critic_forward.1} parent=1 // pred_region
      _
    $region65: #{critic_forward.1} parent=1 // pred_fallthru
      _
    %2876 = vsyncpa [#allocation3], 1
    %2877 = vsyncpa [#allocation5], 1
    %2878 = vsyncpa [#allocation8], 1

</llo_original>
